<compile_context>
chip_gen: v7x
topology: tpu7x:2x2x1
jax: 0.10.0
libtpu: 0.0.40
codegen_flags: <defaults>
</compile_context>

<pallas_src>
import math
import functools

import jax
import jax.numpy as jnp
from jax.experimental import pallas as pl
from jax.experimental.pallas import tpu as pltpu


# ----------------------------- helpers -----------------------------

def _pick_tile(dim, target, base):
    """Largest tile <= target that evenly divides `dim` and is a multiple of
    `base` (TPU (8,128) tiling).  Falls back to the full dim (always legal)."""
    if dim <= target:
        return dim
    t = (target // base) * base
    while t >= base:
        if dim % t == 0:
            return t
        t -= base
    return dim


@functools.lru_cache(maxsize=1)
def _vmem_capacity():
    """Physical VMEM capacity; fallback assumes a 128 MiB part (v5e/v6e) so a
    failed query never clamps big chips to small tiles."""
    try:
        return int(pltpu.get_tpu_info().vmem_capacity_bytes)
    except Exception:
        return 128 * 1024 * 1024


def _vmem_limit():
    """Per-generation scoped-VMEM budget: leave ~32 MiB slack on 128 MiB parts,
    3/4 of capacity on smaller (v7x 64 MiB) parts."""
    cap = _vmem_capacity()
    if cap >= 96 * 1024 * 1024:
        return int(cap - 32 * 1024 * 1024)
    return int(cap * 3 // 4)


# ----------------------------- tiled linear -----------------------------

def _linear_kernel(x_ref, w_ref, b_ref, o_ref, acc_ref):
    @pl.when(pl.program_id(2) == 0)
    def _init():
        acc_ref[...] = jnp.zeros_like(acc_ref)

    # bf16 MXU operands, f32 accumulation.
    acc_ref[...] += jnp.dot(x_ref[...].astype(jnp.bfloat16),
                            w_ref[...].astype(jnp.bfloat16),
                            preferred_element_type=jnp.float32)

    @pl.when(pl.program_id(2) == pl.num_programs(2) - 1)
    def _finalize():
        o_ref[...] = (acc_ref[...] + b_ref[...].astype(jnp.float32)
                      ).astype(o_ref.dtype)


def linear(x2d, w, b):
    """x2d: (M, K), w: (K, N), b: (N,) -> (M, N). Tiled, pipelined MXU matmul."""
    M, K = x2d.shape
    N = w.shape[1]
    big_vmem = _vmem_capacity() >= 100 * 1024 * 1024   # v5e/v6e: bigger tiles
    tm = _pick_tile(M, 512 if big_vmem else 256, 8)
    tn = _pick_tile(N, 512 if big_vmem else 256, 128)
    tk = _pick_tile(K, 512, 128)
    grid = (M // tm, N // tn, K // tk)
    itemsize = jnp.dtype(x2d.dtype).itemsize
    return pl.pallas_call(
        _linear_kernel,
        out_shape=jax.ShapeDtypeStruct((M, N), x2d.dtype),
        grid=grid,
        in_specs=[
            pl.BlockSpec((tm, tk), lambda i, j, k: (i, k)),
            pl.BlockSpec((tk, tn), lambda i, j, k: (k, j)),
            pl.BlockSpec((1, tn), lambda i, j, k: (0, j)),
        ],
        out_specs=pl.BlockSpec((tm, tn), lambda i, j, k: (i, j)),
        scratch_shapes=[pltpu.VMEM((tm, tn), jnp.float32)],
        compiler_params=pltpu.CompilerParams(
            dimension_semantics=("parallel", "parallel", "arbitrary"),
            vmem_limit_bytes=_vmem_limit()),
        cost_estimate=pl.CostEstimate(
            flops=2 * M * N * K,
            transcendentals=0,
            bytes_accessed=itemsize * (M * K + K * N + M * N) + 4 * N),
    )(x2d, w, b.reshape(1, N))


# ----------------------------- attention kernel -----------------------------

def _mha_kernel(q_ref, kv_ref, m_ref, o_ref, w_ref, *, num_heads, scale):
    tq, D = q_ref.shape                 # (tq, D) lane-dense q tile
    S_kv = kv_ref.shape[0]
    dk = D // num_heads

    # Hoisted once per grid step:
    #   * q pre-scaled (tq*D mults instead of H*tq*S_kv), then cast to bf16
    #   * K / V slabs cast to bf16 (static column slices of the packed block)
    #   * key-padding mask compare + broadcast
    q = (q_ref[...].astype(jnp.float32) * jnp.float32(scale)).astype(jnp.bfloat16)
    kv = kv_ref[...]
    k = kv[:, :D].astype(jnp.bfloat16)
    v = kv[:, D:].astype(jnp.bfloat16)
    mask_ok = jnp.broadcast_to(m_ref[...] != 0, (tq, S_kv))      # (tq, S_kv) bool

    for h in range(num_heads):          # static unroll, static (sub-lane) slices
        lo = h * dk
        qh = q[:, lo:lo + dk]           # (tq, dk)    bf16
        kh = k[:, lo:lo + dk]           # (S_kv, dk)  bf16
        vh = v[:, lo:lo + dk]           # (S_kv, dk)  bf16
        # q @ k^T without materializing a transpose (contract last dims)
        s = jax.lax.dot_general(qh, kh, (((1,), (1,)), ((), ())),
                                preferred_element_type=jnp.float32)
        # masked_fill semantics (matches PyTorch, incl. fully-masked rows)
        s = jnp.where(mask_ok, s, jnp.float32(-1e9))
        s = s - jnp.max(s, axis=-1, keepdims=True)
        p = jnp.exp(s)
        inv = pl.reciprocal(jnp.sum(p, axis=-1, keepdims=True), approx=True)
        p = p * inv
        w_ref[h, :, :] = p.astype(w_ref.dtype)
        # write this head's columns straight into the output block (VMEM);
        # the pipeline writes the whole (tq, D) slab back lane-dense.
        o_ref[:, lo:lo + dk] = jnp.dot(p.astype(jnp.bfloat16), vh,
                                       preferred_element_type=jnp.float32
                                       ).astype(o_ref.dtype)


def _attention_tq(S_q, S_kv, num_heads):
    """Pick a q-tile so the double-buffered (H, tq, S_kv) f32 weights block
    stays within half the VMEM budget."""
    tq = _pick_tile(S_q, 256, 8)
    budget = _vmem_limit() // 2
    while tq > 8 and 2 * num_heads * tq * S_kv * 4 > budget:
        nxt = _pick_tile(S_q, tq // 2, 8)
        if nxt >= tq:
            break
        tq = nxt
    return tq


def attention(q, kv, mask, *, num_heads, weights_dtype=jnp.float32):
    """q: (B, S_q, D), kv: (B, S_kv, 2D) packed [K | V], mask: (B, 1, S_kv) int32
    -> out (B, S_q, D), attn_weights (B, H, S_q, S_kv)."""
    B, S_q, D = q.shape
    S_kv = kv.shape[1]
    dk = D // num_heads
    scale = 1.0 / math.sqrt(dk)
    tq = _attention_tq(S_q, S_kv, num_heads)
    kernel = functools.partial(_mha_kernel, num_heads=num_heads, scale=scale)
    itemsize = jnp.dtype(q.dtype).itemsize
    return pl.pallas_call(
        kernel,
        out_shape=(jax.ShapeDtypeStruct((B, S_q, D), q.dtype),
                   jax.ShapeDtypeStruct((B, num_heads, S_q, S_kv), weights_dtype)),
        grid=(B, S_q // tq),
        in_specs=[
            pl.BlockSpec((None, tq, D), lambda b, i: (b, i, 0)),
            pl.BlockSpec((None, S_kv, 2 * D), lambda b, i: (b, 0, 0)),
            pl.BlockSpec((None, 1, S_kv), lambda b, i: (b, 0, 0)),
        ],
        out_specs=(
            pl.BlockSpec((None, tq, D), lambda b, i: (b, i, 0)),
            pl.BlockSpec((None, num_heads, tq, S_kv), lambda b, i: (b, 0, i, 0)),
        ),
        compiler_params=pltpu.CompilerParams(
            dimension_semantics=("parallel", "parallel"),
            vmem_limit_bytes=_vmem_limit()),
        cost_estimate=pl.CostEstimate(
            flops=4 * B * num_heads * S_q * S_kv * dk,
            transcendentals=B * num_heads * S_q * S_kv,
            bytes_accessed=itemsize * (2 * B * S_q * D + 2 * B * S_kv * D)
                           + jnp.dtype(weights_dtype).itemsize
                           * B * num_heads * S_q * S_kv
                           + 4 * B * S_kv),
    )(q, kv, mask)


# ----------------------------- module forward -----------------------------

def fuse_kv_params(params):
    """One-time packing of the K/V projection into a single (D, 2D) matmul.
    Call once at setup; avoids a per-forward weight concat through HBM."""
    if "w_kv" in params:
        return params
    out = dict(params)
    out["w_kv"] = jnp.concatenate([params["wk"], params["wv"]], axis=1)
    out["b_kv"] = jnp.concatenate([params["bk"], params["bv"]], axis=0)
    return out


def mha_forward(params, q_in, k_in, v_in, *, num_heads, mask=None):
    """Matches MultiHeadAttention.forward (eval mode): returns (output, attn_weights)."""
    B, S_q, D = q_in.shape
    S_kv = k_in.shape[1]

    q = linear(q_in.reshape(B * S_q, D), params["wq"], params["bq"]).reshape(B, S_q, D)

    # Fused K/V projection when k and v come from the same tensor (object
    # identity check — equal-but-distinct arrays take the fallback path).
    if (k_in is v_in) and ("w_kv" in params):
        kv = linear(k_in.reshape(B * S_kv, D), params["w_kv"], params["b_kv"]
                    ).reshape(B, S_kv, 2 * D)
    else:
        # TODO(synk): distinct k/v sources pay one activation concat through
        # HBM; a split-KV attention kernel variant would remove it.
        kk = linear(k_in.reshape(B * S_kv, D), params["wk"], params["bk"])
        vv = linear(v_in.reshape(B * S_kv, D), params["wv"], params["bv"])
        kv = jnp.concatenate([kk, vv], axis=-1).reshape(B, S_kv, 2 * D)

    if mask is None:
        mask_n = jnp.ones((B, 1, S_kv), jnp.int32)
    else:
        mask_n = mask.reshape(B, 1, S_kv).astype(jnp.int32)

    attn_out, attn_w = attention(q, kv, mask_n, num_heads=num_heads)
    # attention-weight dropout == identity (eval mode)
    out = linear(attn_out.reshape(B * S_q, D), params["wo"], params["bo"]
                 ).reshape(B, S_q, D)
    return out, attn_w


# ----------------------------- pure-JAX reference -----------------------------

def mha_reference(params, q_in, k_in, v_in, *, num_heads, mask=None):
    B, S_q, D = q_in.shape
    S_kv = k_in.shape[1]
    dk = D // num_heads

    def lin(x, w, b):
        return x @ w + b

    q = lin(q_in, params["wq"], params["bq"]).reshape(B, S_q, num_heads, dk).transpose(0, 2, 1, 3)
    k = lin(k_in, params["wk"], params["bk"]).reshape(B, S_kv, num_heads, dk).transpose(0, 2, 1, 3)
    v = lin(v_in, params["wv"], params["bv"]).reshape(B, S_kv, num_heads, dk).transpose(0, 2, 1, 3)
    scores = jnp.einsum("bhqd,bhkd->bhqk", q, k) / math.sqrt(dk)
    if mask is not None:
        scores = jnp.where(mask[:, None, None, :] == 0, jnp.float32(-1e9), scores)
    w = jax.nn.softmax(scores, axis=-1)
    out = jnp.einsum("bhqk,bhkd->bhqd", w, v).transpose(0, 2, 1, 3).reshape(B, S_q, D)
    out = lin(out, params["wo"], params["bo"])
    return out, w


# ----------------------------- params -----------------------------

def init_params(key, d_model):
    ks = jax.random.split(key, 8)

    def xavier(k, shape):
        a = math.sqrt(6.0 / (shape[0] + shape[1]))
        return jax.random.uniform(k, shape, jnp.float32, minval=-a, maxval=a)

    def bias(k, n):
        bound = 1.0 / math.sqrt(d_model)
        return jax.random.uniform(k, (n,), jnp.float32, minval=-bound, maxval=bound)

    return {
        "wq": xavier(ks[0], (d_model, d_model)), "bq": bias(ks[1], d_model),
        "wk": xavier(ks[2], (d_model, d_model)), "bk": bias(ks[3], d_model),
        "wv": xavier(ks[4], (d_model, d_model)), "bv": bias(ks[5], d_model),
        "wo": xavier(ks[6], (d_model, d_model)), "bo": bias(ks[7], d_model),
    }


# ----------------------------- demo -----------------------------

if __name__ == "__main__":
    B, S, D_MODEL, NUM_HEADS = 2, 8, 32, 4

    key = jax.random.PRNGKey(0)
    k_params, k_x = jax.random.split(key)
    params = init_params(k_params, D_MODEL)
    params = fuse_kv_params(params)          # one-time K/V weight packing
    x = jax.random.normal(k_x, (B, S, D_MODEL), jnp.float32)
    # key-padding mask: last 3 key positions of batch 1 are padding
    mask = jnp.ones((B, S), jnp.int32).at[1, -3:].set(0)

    @jax.jit
    def fwd(params, x, mask):
        return mha_forward(params, x, x, x, num_heads=NUM_HEADS, mask=mask)

    out, attn_w = fwd(params, x, mask)
    jax.block_until_ready((out, attn_w))

    out_ref, attn_ref = mha_reference(params, x, x, x, num_heads=NUM_HEADS, mask=mask)

    assert out.shape == (B, S, D_MODEL)
    assert attn_w.shape == (B, NUM_HEADS, S, S)
    assert bool(jnp.all(jnp.isfinite(out)))
    assert bool(jnp.all(jnp.isfinite(attn_w)))
    # tolerances sized for bf16 MXU operands with f32 accumulation
    assert float(jnp.max(jnp.abs(out - out_ref))) < 1e-1
    assert float(jnp.max(jnp.abs(attn_w - attn_ref))) < 5e-2
    print("KERNEL_OK")
</pallas_src>

<mosaic_0001>
module attributes {stable_mosaic.version = 11 : i64} {
  func.func @_linear_kernel(%arg0: i32, %arg1: i32, %arg2: i32, %arg3: memref<16x32xf32, #tpu.memory_space<vmem>>, %arg4: memref<32x32xf32, #tpu.memory_space<vmem>>, %arg5: memref<1x32xf32, #tpu.memory_space<vmem>>, %arg6: memref<16x32xf32, #tpu.memory_space<vmem>>, %arg7: memref<16x32xf32, #tpu.memory_space<vmem>>) attributes {dimension_semantics = [#tpu.dimension_semantics<parallel>, #tpu.dimension_semantics<parallel>, #tpu.dimension_semantics<arbitrary>], iteration_bounds = array<i64: 1, 1, 1>, scalar_prefetch = 0 : i64, scratch_operands = 1 : i64, tpu.core_type = #tpu.core_type<tc>, window_params = [{transform_indices = @transform_0, window_bounds = array<i64: 16, 32>}, {transform_indices = @transform_1, window_bounds = array<i64: 32, 32>}, {transform_indices = @transform_2, window_bounds = array<i64: 1, 32>}, {transform_indices = @transform_3, window_bounds = array<i64: 16, 32>}]} {
    %c0_i32 = arith.constant 0 : i32
    %0 = arith.cmpi eq, %arg2, %c0_i32 : i32
    %1 = arith.extui %0 : i1 to i32
    %c0_i32_0 = arith.constant 0 : i32
    %2 = arith.cmpi ne, %1, %c0_i32_0 : i32
    scf.if %2 {
      %cst_10 = arith.constant 0.000000e+00 : f32
      %14 = vector.broadcast %cst_10 : f32 to vector<16x32xf32>
      %c0_11 = arith.constant 0 : index
      %c0_12 = arith.constant 0 : index
      %15 = vector.load %arg7[%c0_11, %c0_12] : memref<16x32xf32, #tpu.memory_space<vmem>>, vector<16x32xf32>
      tpu.vector_store %arg7[%c0_11, %c0_12], %14 {strides = array<i32>} : memref<16x32xf32, #tpu.memory_space<vmem>>, vector<16x32xf32>,
    } else {
    }
    %c0 = arith.constant 0 : index
    %c0_1 = arith.constant 0 : index
    %3 = vector.load %arg7[%c0, %c0_1] : memref<16x32xf32, #tpu.memory_space<vmem>>, vector<16x32xf32>
    %c0_2 = arith.constant 0 : index
    %c0_3 = arith.constant 0 : index
    %4 = vector.load %arg3[%c0_2, %c0_3] : memref<16x32xf32, #tpu.memory_space<vmem>>, vector<16x32xf32>
    %5 = arith.truncf %4 : vector<16x32xf32> to vector<16x32xbf16>
    %c0_4 = arith.constant 0 : index
    %c0_5 = arith.constant 0 : index
    %6 = vector.load %arg4[%c0_4, %c0_5] : memref<32x32xf32, #tpu.memory_space<vmem>>, vector<32x32xf32>
    %7 = arith.truncf %6 : vector<32x32xf32> to vector<32x32xbf16>
    %cst = arith.constant dense<0.000000e+00> : vector<16x32xf32>
    %8 = tpu.matmul %5, %7, %cst {dimension_numbers = #tpu.dot_dimension_numbers<[1], [0], [0], [1], [0, 0, 1, 1], [], []>} : vector<16x32xbf16>, vector<32x32xbf16>, vector<16x32xf32> -> vector<16x32xf32>
    %9 = arith.addf %3, %8 : vector<16x32xf32>
    %c0_6 = arith.constant 0 : index
    %c0_7 = arith.constant 0 : index
    %10 = vector.load %arg7[%c0_6, %c0_7] : memref<16x32xf32, #tpu.memory_space<vmem>>, vector<16x32xf32>
    tpu.vector_store %arg7[%c0_6, %c0_7], %9 {strides = array<i32>} : memref<16x32xf32, #tpu.memory_space<vmem>>, vector<16x32xf32>,
    %c0_i32_8 = arith.constant 0 : i32
    %11 = arith.cmpi eq, %arg2, %c0_i32_8 : i32
    %12 = arith.extui %11 : i1 to i32
    %c0_i32_9 = arith.constant 0 : i32
    %13 = arith.cmpi ne, %12, %c0_i32_9 : i32
    scf.if %13 {
      %c0_10 = arith.constant 0 : index
      %c0_11 = arith.constant 0 : index
      %14 = vector.load %arg7[%c0_10, %c0_11] : memref<16x32xf32, #tpu.memory_space<vmem>>, vector<16x32xf32>
      %c0_12 = arith.constant 0 : index
      %c0_13 = arith.constant 0 : index
      %15 = vector.load %arg5[%c0_12, %c0_13] : memref<1x32xf32, #tpu.memory_space<vmem>>, vector<1x32xf32>
      %16 = vector.broadcast %15 : vector<1x32xf32> to vector<16x32xf32>
      %17 = arith.addf %14, %16 : vector<16x32xf32>
      %c0_14 = arith.constant 0 : index
      %c0_15 = arith.constant 0 : index
      %18 = vector.load %arg6[%c0_14, %c0_15] : memref<16x32xf32, #tpu.memory_space<vmem>>, vector<16x32xf32>
      tpu.vector_store %arg6[%c0_14, %c0_15], %17 {strides = array<i32>} : memref<16x32xf32, #tpu.memory_space<vmem>>, vector<16x32xf32>,
    } else {
    }
    return
  }
  func.func @transform_0(%arg0: i32, %arg1: i32, %arg2: i32) -> (i32, i32) {
    %c0_i32 = arith.constant 0 : i32
    return %arg0, %arg2 : i32, i32
  }
  func.func @transform_1(%arg0: i32, %arg1: i32, %arg2: i32) -> (i32, i32) {
    %c0_i32 = arith.constant 0 : i32
    return %arg2, %arg1 : i32, i32
  }
  func.func @transform_2(%arg0: i32, %arg1: i32, %arg2: i32) -> (i32, i32) {
    %c0_i32 = arith.constant 0 : i32
    %c0_i32_0 = arith.constant 0 : i32
    return %c0_i32, %arg1 : i32, i32
  }
  func.func @transform_3(%arg0: i32, %arg1: i32, %arg2: i32) -> (i32, i32) {
    %c0_i32 = arith.constant 0 : i32
    return %arg0, %arg1 : i32, i32
  }
}

module attributes {stable_mosaic.version = 11 : i64} {
  func.func @_linear_kernel(%arg0: i32, %arg1: i32, %arg2: i32, %arg3: memref<16x32xf32, #tpu.memory_space<vmem>>, %arg4: memref<32x64xf32, #tpu.memory_space<vmem>>, %arg5: memref<1x64xf32, #tpu.memory_space<vmem>>, %arg6: memref<16x64xf32, #tpu.memory_space<vmem>>, %arg7: memref<16x64xf32, #tpu.memory_space<vmem>>) attributes {dimension_semantics = [#tpu.dimension_semantics<parallel>, #tpu.dimension_semantics<parallel>, #tpu.dimension_semantics<arbitrary>], iteration_bounds = array<i64: 1, 1, 1>, scalar_prefetch = 0 : i64, scratch_operands = 1 : i64, tpu.core_type = #tpu.core_type<tc>, window_params = [{transform_indices = @transform_0, window_bounds = array<i64: 16, 32>}, {transform_indices = @transform_1, window_bounds = array<i64: 32, 64>}, {transform_indices = @transform_2, window_bounds = array<i64: 1, 64>}, {transform_indices = @transform_3, window_bounds = array<i64: 16, 64>}]} {
    %c0_i32 = arith.constant 0 : i32
    %0 = arith.cmpi eq, %arg2, %c0_i32 : i32
    %1 = arith.extui %0 : i1 to i32
    %c0_i32_0 = arith.constant 0 : i32
    %2 = arith.cmpi ne, %1, %c0_i32_0 : i32
    scf.if %2 {
      %cst_10 = arith.constant 0.000000e+00 : f32
      %14 = vector.broadcast %cst_10 : f32 to vector<16x64xf32>
      %c0_11 = arith.constant 0 : index
      %c0_12 = arith.constant 0 : index
      %15 = vector.load %arg7[%c0_11, %c0_12] : memref<16x64xf32, #tpu.memory_space<vmem>>, vector<16x64xf32>
      tpu.vector_store %arg7[%c0_11, %c0_12], %14 {strides = array<i32>} : memref<16x64xf32, #tpu.memory_space<vmem>>, vector<16x64xf32>,
    } else {
    }
    %c0 = arith.constant 0 : index
    %c0_1 = arith.constant 0 : index
    %3 = vector.load %arg7[%c0, %c0_1] : memref<16x64xf32, #tpu.memory_space<vmem>>, vector<16x64xf32>
    %c0_2 = arith.constant 0 : index
    %c0_3 = arith.constant 0 : index
    %4 = vector.load %arg3[%c0_2, %c0_3] : memref<16x32xf32, #tpu.memory_space<vmem>>, vector<16x32xf32>
    %5 = arith.truncf %4 : vector<16x32xf32> to vector<16x32xbf16>
    %c0_4 = arith.constant 0 : index
    %c0_5 = arith.constant 0 : index
    %6 = vector.load %arg4[%c0_4, %c0_5] : memref<32x64xf32, #tpu.memory_space<vmem>>, vector<32x64xf32>
    %7 = arith.truncf %6 : vector<32x64xf32> to vector<32x64xbf16>
    %cst = arith.constant dense<0.000000e+00> : vector<16x64xf32>
    %8 = tpu.matmul %5, %7, %cst {dimension_numbers = #tpu.dot_dimension_numbers<[1], [0], [0], [1], [0, 0, 1, 1], [], []>} : vector<16x32xbf16>, vector<32x64xbf16>, vector<16x64xf32> -> vector<16x64xf32>
    %9 = arith.addf %3, %8 : vector<16x64xf32>
    %c0_6 = arith.constant 0 : index
    %c0_7 = arith.constant 0 : index
    %10 = vector.load %arg7[%c0_6, %c0_7] : memref<16x64xf32, #tpu.memory_space<vmem>>, vector<16x64xf32>
    tpu.vector_store %arg7[%c0_6, %c0_7], %9 {strides = array<i32>} : memref<16x64xf32, #tpu.memory_space<vmem>>, vector<16x64xf32>,
    %c0_i32_8 = arith.constant 0 : i32
    %11 = arith.cmpi eq, %arg2, %c0_i32_8 : i32
    %12 = arith.extui %11 : i1 to i32
    %c0_i32_9 = arith.constant 0 : i32
    %13 = arith.cmpi ne, %12, %c0_i32_9 : i32
    scf.if %13 {
      %c0_10 = arith.constant 0 : index
      %c0_11 = arith.constant 0 : index
      %14 = vector.load %arg7[%c0_10, %c0_11] : memref<16x64xf32, #tpu.memory_space<vmem>>, vector<16x64xf32>
      %c0_12 = arith.constant 0 : index
      %c0_13 = arith.constant 0 : index
      %15 = vector.load %arg5[%c0_12, %c0_13] : memref<1x64xf32, #tpu.memory_space<vmem>>, vector<1x64xf32>
      %16 = vector.broadcast %15 : vector<1x64xf32> to vector<16x64xf32>
      %17 = arith.addf %14, %16 : vector<16x64xf32>
      %c0_14 = arith.constant 0 : index
      %c0_15 = arith.constant 0 : index
      %18 = vector.load %arg6[%c0_14, %c0_15] : memref<16x64xf32, #tpu.memory_space<vmem>>, vector<16x64xf32>
      tpu.vector_store %arg6[%c0_14, %c0_15], %17 {strides = array<i32>} : memref<16x64xf32, #tpu.memory_space<vmem>>, vector<16x64xf32>,
    } else {
    }
    return
  }
  func.func @transform_0(%arg0: i32, %arg1: i32, %arg2: i32) -> (i32, i32) {
    %c0_i32 = arith.constant 0 : i32
    return %arg0, %arg2 : i32, i32
  }
  func.func @transform_1(%arg0: i32, %arg1: i32, %arg2: i32) -> (i32, i32) {
    %c0_i32 = arith.constant 0 : i32
    return %arg2, %arg1 : i32, i32
  }
  func.func @transform_2(%arg0: i32, %arg1: i32, %arg2: i32) -> (i32, i32) {
    %c0_i32 = arith.constant 0 : i32
    %c0_i32_0 = arith.constant 0 : i32
    return %c0_i32, %arg1 : i32, i32
  }
  func.func @transform_3(%arg0: i32, %arg1: i32, %arg2: i32) -> (i32, i32) {
    %c0_i32 = arith.constant 0 : i32
    return %arg0, %arg1 : i32, i32
  }
}

module attributes {stable_mosaic.version = 11 : i64} {
  func.func @_mha_kernel(%arg0: i32, %arg1: i32, %arg2: memref<1x8x32xf32, #tpu.memory_space<vmem>>, %arg3: memref<1x8x64xf32, #tpu.memory_space<vmem>>, %arg4: memref<1x1x8xi32, #tpu.memory_space<vmem>>, %arg5: memref<1x8x32xf32, #tpu.memory_space<vmem>>, %arg6: memref<1x4x8x8xf32, #tpu.memory_space<vmem>>) attributes {dimension_semantics = [#tpu.dimension_semantics<parallel>, #tpu.dimension_semantics<parallel>], iteration_bounds = array<i64: 2, 1>, scalar_prefetch = 0 : i64, scratch_operands = 0 : i64, tpu.core_type = #tpu.core_type<tc>, window_params = [{transform_indices = @transform_0, window_bounds = array<i64: 1, 8, 32>}, {transform_indices = @transform_1, window_bounds = array<i64: 1, 8, 64>}, {transform_indices = @transform_2, window_bounds = array<i64: 1, 1, 8>}, {transform_indices = @transform_3, window_bounds = array<i64: 1, 8, 32>}, {transform_indices = @transform_4, window_bounds = array<i64: 1, 4, 8, 8>}]} {
    %c0 = arith.constant 0 : index
    %c0_0 = arith.constant 0 : index
    %c0_1 = arith.constant 0 : index
    %0 = vector.load %arg2[%c0, %c0_0, %c0_1] : memref<1x8x32xf32, #tpu.memory_space<vmem>>, vector<1x8x32xf32>
    %1 = vector.shape_cast %0 : vector<1x8x32xf32> to vector<8x32xf32>
    %cst = arith.constant 0.353553385 : f32
    %2 = vector.broadcast %cst : f32 to vector<8x32xf32>
    %3 = arith.mulf %1, %2 : vector<8x32xf32>
    %4 = arith.truncf %3 : vector<8x32xf32> to vector<8x32xbf16>
    %c0_2 = arith.constant 0 : index
    %c0_3 = arith.constant 0 : index
    %c0_4 = arith.constant 0 : index
    %5 = vector.load %arg3[%c0_2, %c0_3, %c0_4] : memref<1x8x64xf32, #tpu.memory_space<vmem>>, vector<1x8x64xf32>
    %6 = vector.shape_cast %5 : vector<1x8x64xf32> to vector<8x64xf32>
    %7 = vector.extract_strided_slice %6 {offsets = [0, 0], sizes = [8, 32], strides = [1, 1]} : vector<8x64xf32> to vector<8x32xf32>
    %8 = arith.truncf %7 : vector<8x32xf32> to vector<8x32xbf16>
    %9 = vector.extract_strided_slice %6 {offsets = [0, 32], sizes = [8, 32], strides = [1, 1]} : vector<8x64xf32> to vector<8x32xf32>
    %10 = arith.truncf %9 : vector<8x32xf32> to vector<8x32xbf16>
    %c0_5 = arith.constant 0 : index
    %c0_6 = arith.constant 0 : index
    %c0_7 = arith.constant 0 : index
    %11 = vector.load %arg4[%c0_5, %c0_6, %c0_7] : memref<1x1x8xi32, #tpu.memory_space<vmem>>, vector<1x1x8xi32>
    %12 = vector.shape_cast %11 : vector<1x1x8xi32> to vector<1x8xi32>
    %c0_i32 = arith.constant 0 : i32
    %13 = vector.broadcast %c0_i32 : i32 to vector<1x8xi32>
    %14 = arith.cmpi ne, %12, %13 : vector<1x8xi32>
    %15 = vector.shape_cast %14 : vector<1x8xi1> to vector<1x8xi1>
    %16 = vector.broadcast %15 : vector<1x8xi1> to vector<8x8xi1>
    %17 = vector.extract_strided_slice %4 {offsets = [0, 0], sizes = [8, 8], strides = [1, 1]} : vector<8x32xbf16> to vector<8x8xbf16>
    %18 = vector.extract_strided_slice %8 {offsets = [0, 0], sizes = [8, 8], strides = [1, 1]} : vector<8x32xbf16> to vector<8x8xbf16>
    %19 = vector.extract_strided_slice %10 {offsets = [0, 0], sizes = [8, 8], strides = [1, 1]} : vector<8x32xbf16> to vector<8x8xbf16>
    %cst_8 = arith.constant dense<0.000000e+00> : vector<8x8xf32>
    %20 = tpu.matmul %17, %18, %cst_8 {dimension_numbers = #tpu.dot_dimension_numbers<[1], [1], [0], [0], [0, 0, 1, 0], [], []>} : vector<8x8xbf16>, vector<8x8xbf16>, vector<8x8xf32> -> vector<8x8xf32>
    %cst_9 = arith.constant -1.000000e+09 : f32
    %21 = vector.broadcast %cst_9 : f32 to vector<8x8xf32>
    %22 = arith.select %16, %20, %21 : vector<8x8xi1>, vector<8x8xf32>
    %cst_10 = arith.constant dense<0xFF800000> : vector<8xf32>
    %23 = vector.multi_reduction <maximumf>, %22, %cst_10 [1] : vector<8x8xf32> to vector<8xf32>
    %24 = vector.shape_cast %23 : vector<8xf32> to vector<8x1xf32>
    %25 = vector.broadcast %24 : vector<8x1xf32> to vector<8x8xf32>
    %26 = arith.subf %22, %25 : vector<8x8xf32>
    %27 = math.exp %26 : vector<8x8xf32>
    %cst_11 = arith.constant dense<0.000000e+00> : vector<8xf32>
    %28 = vector.multi_reduction <add>, %27, %cst_11 [1] : vector<8x8xf32> to vector<8xf32>
    %29 = vector.shape_cast %28 : vector<8xf32> to vector<8x1xf32>
    %30 = tpu.reciprocal %29 {approx = true} : vector<8x1xf32> -> vector<8x1xf32>
    %31 = vector.broadcast %30 : vector<8x1xf32> to vector<8x8xf32>
    %32 = arith.mulf %27, %31 : vector<8x8xf32>
    %c0_12 = arith.constant 0 : index
    %c0_13 = arith.constant 0 : index
    %c0_14 = arith.constant 0 : index
    %c0_15 = arith.constant 0 : index
    %33 = vector.load %arg6[%c0_12, %c0_13, %c0_14, %c0_15] : memref<1x4x8x8xf32, #tpu.memory_space<vmem>>, vector<1x1x8x8xf32>
    %34 = vector.shape_cast %33 : vector<1x1x8x8xf32> to vector<8x8xf32>
    %35 = vector.shape_cast %32 : vector<8x8xf32> to vector<1x1x8x8xf32>
    tpu.vector_store %arg6[%c0_12, %c0_13, %c0_14, %c0_15], %35 {strides = array<i32>} : memref<1x4x8x8xf32, #tpu.memory_space<vmem>>, vector<1x1x8x8xf32>,
    %36 = arith.truncf %32 : vector<8x8xf32> to vector<8x8xbf16>
    %cst_16 = arith.constant dense<0.000000e+00> : vector<8x8xf32>
    %37 = tpu.matmul %36, %19, %cst_16 {dimension_numbers = #tpu.dot_dimension_numbers<[1], [0], [0], [1], [0, 0, 1, 1], [], []>} : vector<8x8xbf16>, vector<8x8xbf16>, vector<8x8xf32> -> vector<8x8xf32>
    %c0_17 = arith.constant 0 : index
    %c0_18 = arith.constant 0 : index
    %c0_19 = arith.constant 0 : index
    %38 = vector.load %arg5[%c0_17, %c0_18, %c0_19] : memref<1x8x32xf32, #tpu.memory_space<vmem>>, vector<1x8x8xf32>
    %39 = vector.shape_cast %38 : vector<1x8x8xf32> to vector<8x8xf32>
    %40 = vector.shape_cast %37 : vector<8x8xf32> to vector<1x8x8xf32>
    tpu.vector_store %arg5[%c0_17, %c0_18, %c0_19], %40 {strides = array<i32>} : memref<1x8x32xf32, #tpu.memory_space<vmem>>, vector<1x8x8xf32>,
    %41 = vector.extract_strided_slice %4 {offsets = [0, 8], sizes = [8, 8], strides = [1, 1]} : vector<8x32xbf16> to vector<8x8xbf16>
    %42 = vector.extract_strided_slice %8 {offsets = [0, 8], sizes = [8, 8], strides = [1, 1]} : vector<8x32xbf16> to vector<8x8xbf16>
    %43 = vector.extract_strided_slice %10 {offsets = [0, 8], sizes = [8, 8], strides = [1, 1]} : vector<8x32xbf16> to vector<8x8xbf16>
    %cst_20 = arith.constant dense<0.000000e+00> : vector<8x8xf32>
    %44 = tpu.matmul %41, %42, %cst_20 {dimension_numbers = #tpu.dot_dimension_numbers<[1], [1], [0], [0], [0, 0, 1, 0], [], []>} : vector<8x8xbf16>, vector<8x8xbf16>, vector<8x8xf32> -> vector<8x8xf32>
    %cst_21 = arith.constant -1.000000e+09 : f32
    %45 = vector.broadcast %cst_21 : f32 to vector<8x8xf32>
    %46 = arith.select %16, %44, %45 : vector<8x8xi1>, vector<8x8xf32>
    %cst_22 = arith.constant dense<0xFF800000> : vector<8xf32>
    %47 = vector.multi_reduction <maximumf>, %46, %cst_22 [1] : vector<8x8xf32> to vector<8xf32>
    %48 = vector.shape_cast %47 : vector<8xf32> to vector<8x1xf32>
    %49 = vector.broadcast %48 : vector<8x1xf32> to vector<8x8xf32>
    %50 = arith.subf %46, %49 : vector<8x8xf32>
    %51 = math.exp %50 : vector<8x8xf32>
    %cst_23 = arith.constant dense<0.000000e+00> : vector<8xf32>
    %52 = vector.multi_reduction <add>, %51, %cst_23 [1] : vector<8x8xf32> to vector<8xf32>
    %53 = vector.shape_cast %52 : vector<8xf32> to vector<8x1xf32>
    %54 = tpu.reciprocal %53 {approx = true} : vector<8x1xf32> -> vector<8x1xf32>
    %55 = vector.broadcast %54 : vector<8x1xf32> to vector<8x8xf32>
    %56 = arith.mulf %51, %55 : vector<8x8xf32>
    %c0_24 = arith.constant 0 : index
    %c1 = arith.constant 1 : index
    %c0_25 = arith.constant 0 : index
    %c0_26 = arith.constant 0 : index
    %57 = vector.load %arg6[%c0_24, %c1, %c0_25, %c0_26] : memref<1x4x8x8xf32, #tpu.memory_space<vmem>>, vector<1x1x8x8xf32>
    %58 = vector.shape_cast %57 : vector<1x1x8x8xf32> to vector<8x8xf32>
    %59 = vector.shape_cast %56 : vector<8x8xf32> to vector<1x1x8x8xf32>
    tpu.vector_store %arg6[%c0_24, %c1, %c0_25, %c0_26], %59 {strides = array<i32>} : memref<1x4x8x8xf32, #tpu.memory_space<vmem>>, vector<1x1x8x8xf32>,
    %60 = arith.truncf %56 : vector<8x8xf32> to vector<8x8xbf16>
    %cst_27 = arith.constant dense<0.000000e+00> : vector<8x8xf32>
    %61 = tpu.matmul %60, %43, %cst_27 {dimension_numbers = #tpu.dot_dimension_numbers<[1], [0], [0], [1], [0, 0, 1, 1], [], []>} : vector<8x8xbf16>, vector<8x8xbf16>, vector<8x8xf32> -> vector<8x8xf32>
    %c0_28 = arith.constant 0 : index
    %c0_29 = arith.constant 0 : index
    %c8 = arith.constant 8 : index
    %62 = vector.load %arg5[%c0_28, %c0_29, %c8] : memref<1x8x32xf32, #tpu.memory_space<vmem>>, vector<1x8x8xf32>
    %63 = vector.shape_cast %62 : vector<1x8x8xf32> to vector<8x8xf32>
    %64 = vector.shape_cast %61 : vector<8x8xf32> to vector<1x8x8xf32>
    tpu.vector_store %arg5[%c0_28, %c0_29, %c8], %64 {strides = array<i32>} : memref<1x8x32xf32, #tpu.memory_space<vmem>>, vector<1x8x8xf32>,
    %65 = vector.extract_strided_slice %4 {offsets = [0, 16], sizes = [8, 8], strides = [1, 1]} : vector<8x32xbf16> to vector<8x8xbf16>
    %66 = vector.extract_strided_slice %8 {offsets = [0, 16], sizes = [8, 8], strides = [1, 1]} : vector<8x32xbf16> to vector<8x8xbf16>
    %67 = vector.extract_strided_slice %10 {offsets = [0, 16], sizes = [8, 8], strides = [1, 1]} : vector<8x32xbf16> to vector<8x8xbf16>
    %cst_30 = arith.constant dense<0.000000e+00> : vector<8x8xf32>
    %68 = tpu.matmul %65, %66, %cst_30 {dimension_numbers = #tpu.dot_dimension_numbers<[1], [1], [0], [0], [0, 0, 1, 0], [], []>} : vector<8x8xbf16>, vector<8x8xbf16>, vector<8x8xf32> -> vector<8x8xf32>
    %cst_31 = arith.constant -1.000000e+09 : f32
    %69 = vector.broadcast %cst_31 : f32 to vector<8x8xf32>
    %70 = arith.select %16, %68, %69 : vector<8x8xi1>, vector<8x8xf32>
    %cst_32 = arith.constant dense<0xFF800000> : vector<8xf32>
    %71 = vector.multi_reduction <maximumf>, %70, %cst_32 [1] : vector<8x8xf32> to vector<8xf32>
    %72 = vector.shape_cast %71 : vector<8xf32> to vector<8x1xf32>
    %73 = vector.broadcast %72 : vector<8x1xf32> to vector<8x8xf32>
    %74 = arith.subf %70, %73 : vector<8x8xf32>
    %75 = math.exp %74 : vector<8x8xf32>
    %cst_33 = arith.constant dense<0.000000e+00> : vector<8xf32>
    %76 = vector.multi_reduction <add>, %75, %cst_33 [1] : vector<8x8xf32> to vector<8xf32>
    %77 = vector.shape_cast %76 : vector<8xf32> to vector<8x1xf32>
    %78 = tpu.reciprocal %77 {approx = true} : vector<8x1xf32> -> vector<8x1xf32>
    %79 = vector.broadcast %78 : vector<8x1xf32> to vector<8x8xf32>
    %80 = arith.mulf %75, %79 : vector<8x8xf32>
    %c0_34 = arith.constant 0 : index
    %c2 = arith.constant 2 : index
    %c0_35 = arith.constant 0 : index
    %c0_36 = arith.constant 0 : index
    %81 = vector.load %arg6[%c0_34, %c2, %c0_35, %c0_36] : memref<1x4x8x8xf32, #tpu.memory_space<vmem>>, vector<1x1x8x8xf32>
    %82 = vector.shape_cast %81 : vector<1x1x8x8xf32> to vector<8x8xf32>
    %83 = vector.shape_cast %80 : vector<8x8xf32> to vector<1x1x8x8xf32>
    tpu.vector_store %arg6[%c0_34, %c2, %c0_35, %c0_36], %83 {strides = array<i32>} : memref<1x4x8x8xf32, #tpu.memory_space<vmem>>, vector<1x1x8x8xf32>,
    %84 = arith.truncf %80 : vector<8x8xf32> to vector<8x8xbf16>
    %cst_37 = arith.constant dense<0.000000e+00> : vector<8x8xf32>
    %85 = tpu.matmul %84, %67, %cst_37 {dimension_numbers = #tpu.dot_dimension_numbers<[1], [0], [0], [1], [0, 0, 1, 1], [], []>} : vector<8x8xbf16>, vector<8x8xbf16>, vector<8x8xf32> -> vector<8x8xf32>
    %c0_38 = arith.constant 0 : index
    %c0_39 = arith.constant 0 : index
    %c16 = arith.constant 16 : index
    %86 = vector.load %arg5[%c0_38, %c0_39, %c16] : memref<1x8x32xf32, #tpu.memory_space<vmem>>, vector<1x8x8xf32>
    %87 = vector.shape_cast %86 : vector<1x8x8xf32> to vector<8x8xf32>
    %88 = vector.shape_cast %85 : vector<8x8xf32> to vector<1x8x8xf32>
    tpu.vector_store %arg5[%c0_38, %c0_39, %c16], %88 {strides = array<i32>} : memref<1x8x32xf32, #tpu.memory_space<vmem>>, vector<1x8x8xf32>,
    %89 = vector.extract_strided_slice %4 {offsets = [0, 24], sizes = [8, 8], strides = [1, 1]} : vector<8x32xbf16> to vector<8x8xbf16>
    %90 = vector.extract_strided_slice %8 {offsets = [0, 24], sizes = [8, 8], strides = [1, 1]} : vector<8x32xbf16> to vector<8x8xbf16>
    %91 = vector.extract_strided_slice %10 {offsets = [0, 24], sizes = [8, 8], strides = [1, 1]} : vector<8x32xbf16> to vector<8x8xbf16>
    %cst_40 = arith.constant dense<0.000000e+00> : vector<8x8xf32>
    %92 = tpu.matmul %89, %90, %cst_40 {dimension_numbers = #tpu.dot_dimension_numbers<[1], [1], [0], [0], [0, 0, 1, 0], [], []>} : vector<8x8xbf16>, vector<8x8xbf16>, vector<8x8xf32> -> vector<8x8xf32>
    %cst_41 = arith.constant -1.000000e+09 : f32
    %93 = vector.broadcast %cst_41 : f32 to vector<8x8xf32>
    %94 = arith.select %16, %92, %93 : vector<8x8xi1>, vector<8x8xf32>
    %cst_42 = arith.constant dense<0xFF800000> : vector<8xf32>
    %95 = vector.multi_reduction <maximumf>, %94, %cst_42 [1] : vector<8x8xf32> to vector<8xf32>
    %96 = vector.shape_cast %95 : vector<8xf32> to vector<8x1xf32>
    %97 = vector.broadcast %96 : vector<8x1xf32> to vector<8x8xf32>
    %98 = arith.subf %94, %97 : vector<8x8xf32>
    %99 = math.exp %98 : vector<8x8xf32>
    %cst_43 = arith.constant dense<0.000000e+00> : vector<8xf32>
    %100 = vector.multi_reduction <add>, %99, %cst_43 [1] : vector<8x8xf32> to vector<8xf32>
    %101 = vector.shape_cast %100 : vector<8xf32> to vector<8x1xf32>
    %102 = tpu.reciprocal %101 {approx = true} : vector<8x1xf32> -> vector<8x1xf32>
    %103 = vector.broadcast %102 : vector<8x1xf32> to vector<8x8xf32>
    %104 = arith.mulf %99, %103 : vector<8x8xf32>
    %c0_44 = arith.constant 0 : index
    %c3 = arith.constant 3 : index
    %c0_45 = arith.constant 0 : index
    %c0_46 = arith.constant 0 : index
    %105 = vector.load %arg6[%c0_44, %c3, %c0_45, %c0_46] : memref<1x4x8x8xf32, #tpu.memory_space<vmem>>, vector<1x1x8x8xf32>
    %106 = vector.shape_cast %105 : vector<1x1x8x8xf32> to vector<8x8xf32>
    %107 = vector.shape_cast %104 : vector<8x8xf32> to vector<1x1x8x8xf32>
    tpu.vector_store %arg6[%c0_44, %c3, %c0_45, %c0_46], %107 {strides = array<i32>} : memref<1x4x8x8xf32, #tpu.memory_space<vmem>>, vector<1x1x8x8xf32>,
    %108 = arith.truncf %104 : vector<8x8xf32> to vector<8x8xbf16>
    %cst_47 = arith.constant dense<0.000000e+00> : vector<8x8xf32>
    %109 = tpu.matmul %108, %91, %cst_47 {dimension_numbers = #tpu.dot_dimension_numbers<[1], [0], [0], [1], [0, 0, 1, 1], [], []>} : vector<8x8xbf16>, vector<8x8xbf16>, vector<8x8xf32> -> vector<8x8xf32>
    %c0_48 = arith.constant 0 : index
    %c0_49 = arith.constant 0 : index
    %c24 = arith.constant 24 : index
    %110 = vector.load %arg5[%c0_48, %c0_49, %c24] : memref<1x8x32xf32, #tpu.memory_space<vmem>>, vector<1x8x8xf32>
    %111 = vector.shape_cast %110 : vector<1x8x8xf32> to vector<8x8xf32>
    %112 = vector.shape_cast %109 : vector<8x8xf32> to vector<1x8x8xf32>
    tpu.vector_store %arg5[%c0_48, %c0_49, %c24], %112 {strides = array<i32>} : memref<1x8x32xf32, #tpu.memory_space<vmem>>, vector<1x8x8xf32>,
    return
  }
  func.func @transform_0(%arg0: i32, %arg1: i32) -> (i32, i32, i32) {
    %c0_i32 = arith.constant 0 : i32
    %c0_i32_0 = arith.constant 0 : i32
    return %arg0, %arg1, %c0_i32 : i32, i32, i32
  }
  func.func @transform_1(%arg0: i32, %arg1: i32) -> (i32, i32, i32) {
    %c0_i32 = arith.constant 0 : i32
    %c0_i32_0 = arith.constant 0 : i32
    %c0_i32_1 = arith.constant 0 : i32
    return %arg0, %c0_i32, %c0_i32_0 : i32, i32, i32
  }
  func.func @transform_2(%arg0: i32, %arg1: i32) -> (i32, i32, i32) {
    %c0_i32 = arith.constant 0 : i32
    %c0_i32_0 = arith.constant 0 : i32
    %c0_i32_1 = arith.constant 0 : i32
    return %arg0, %c0_i32, %c0_i32_0 : i32, i32, i32
  }
  func.func @transform_3(%arg0: i32, %arg1: i32) -> (i32, i32, i32) {
    %c0_i32 = arith.constant 0 : i32
    %c0_i32_0 = arith.constant 0 : i32
    return %arg0, %arg1, %c0_i32 : i32, i32, i32
  }
  func.func @transform_4(%arg0: i32, %arg1: i32) -> (i32, i32, i32, i32) {
    %c0_i32 = arith.constant 0 : i32
    %c0_i32_0 = arith.constant 0 : i32
    %c0_i32_1 = arith.constant 0 : i32
    return %arg0, %c0_i32, %arg1, %c0_i32_0 : i32, i32, i32, i32
  }
}

</mosaic_0001>

<llo_original>
// kernel: fwd.5
$region0: #{fwd.5}
  #allocation0 [shape = 'u32[]', space=smem, size = 0x4, offset = 0x4, fixed_abs, tag = 'smem constant byte address 0x4 - core index']
  #allocation1 [shape = 'u32[144,128]{1,0:T(1,128)}', space=vmem, size = 0x12000, scoped, tag = 'internal scratch']
  #allocation2 [shape = 'f32[16,64]{1,0:T(8,128)}', space=vmem, size = 0x2000, scoped, tag = 'scratch operand']
  %s0 = inlined_call_operand.hbm [shape: f32[16,32], index: 0, kind: input, shape index: {}]
  %s1 = inlined_call_operand.hbm [shape: f32[32,64], index: 1, kind: input, shape index: {}]
  %s2 = inlined_call_operand.hbm [shape: f32[1,64], index: 2, kind: input, shape index: {}]
  %s3 = inlined_call_operand.hbm [shape: f32[16,64], index: 3, kind: output, shape index: {}]
  %s4 = sld [smem:[#allocation0]]
  $region42: #{fwd.5} parent=0
    _
  %s6 = ssub.s32 1, %s4
  %s7 = scalar_select 0, %s6, %s4
  $region1: #{fwd.5} parent=0
    #allocation3 [shape = 'u8[8192]{0}', space=vmem, size = 0x2000, scoped, tag = 'input window, operand 0, single buffered']
    #allocation4 [shape = 's32[1]{0}', space=sflag, size = 0x4, scoped, tag = 'scoped memory for fwd.5']
    #allocation5 [shape = 's32[1]{0}', space=sflag, size = 0x4, scoped, tag = 'scoped memory for fwd.5']
    #allocation6 [shape = 'u8[16384]{0}', space=vmem, size = 0x4000, scoped, tag = 'input window, operand 1, single buffered']
    #allocation7 [shape = 's32[1]{0}', space=sflag, size = 0x4, scoped, tag = 'scoped memory for fwd.5']
    #allocation8 [shape = 'u8[512]{0}', space=vmem, size = 0x400, scoped, tag = 'input window, operand 2, single buffered']
    #allocation9 [shape = 'u8[8192]{0}', space=vmem, size = 0x2000, scoped, tag = 'output window, operand 0, single buffered']
    %8 = vsyncpa [#allocation4], 0
    %9 = vsyncpa [#allocation7], 0
    %10 = vsyncpa [#allocation5], 0
    // Predicated region
    $region2: #{fwd.5} parent=1 // pred_check
      _
    $region3: #{fwd.5} parent=1 // pred_check_branch
      %12 = sbr.rel (0) target = $region5
    $region4: #{fwd.5} parent=1 // pred_region
      %s14 = ssub.s32 256, 256
      %15 = vsyncadd [#allocation4], %s14
      %s16 = sshll.u32 [#allocation3], 4
      %s17 = int_to_ptr.vmem [resolvable:$true] %s16
      %22 = dma.hbm_to_vmem [thread:$0]  %s0, 256, %s17, [#allocation4], 128, 128, 8
    $region5: #{fwd.5} parent=1 // pred_fallthru
      _
    // Predicated region
    $region6: #{fwd.5} parent=1 // pred_check
      _
    $region7: #{fwd.5} parent=1 // pred_check_branch
      %24 = sbr.rel (0) target = $region9
    $region8: #{fwd.5} parent=1 // pred_region
      %s26 = ssub.s32 512, 512
      %27 = vsyncadd [#allocation7], %s26
      %s28 = sshll.u32 [#allocation6], 4
      %s29 = int_to_ptr.vmem [resolvable:$true] %s28
      %34 = dma.hbm_to_vmem [thread:$0]  %s1, 512, %s29, [#allocation7], 128, 128, 8
    $region9: #{fwd.5} parent=1 // pred_fallthru
      _
    // Predicated region
    $region10: #{fwd.5} parent=1 // pred_check
      _
    $region11: #{fwd.5} parent=1 // pred_check_branch
      %36 = sbr.rel (0) target = $region13
    $region12: #{fwd.5} parent=1 // pred_region
      %s38 = ssub.s32 16, 16
      %39 = vsyncadd [#allocation7], %s38
      %s41 = sshll.u32 [#allocation8], 4
      %s42 = int_to_ptr.vmem [resolvable:$true] %s41
      %44 = dma.hbm_to_vmem [thread:$0]  %s2, 16, %s42, [#allocation7]
    $region13: #{fwd.5} parent=1 // pred_fallthru
      _
    // Predicated region
    $region14: #{fwd.5} parent=1 // pred_check
      _
    $region15: #{fwd.5} parent=1 // pred_check_branch
      %46 = sbr.rel (0) target = $region17
    $region16: #{fwd.5} parent=1 // pred_region
      %47 = dma.done [#allocation4], 256
    $region17: #{fwd.5} parent=1 // pred_fallthru
      _
    // Predicated region
    $region18: #{fwd.5} parent=1 // pred_check
      _
    $region19: #{fwd.5} parent=1 // pred_check_branch
      %49 = sbr.rel (0) target = $region21
    $region20: #{fwd.5} parent=1 // pred_region
      %50 = dma.done [#allocation7], 512
    $region21: #{fwd.5} parent=1 // pred_fallthru
      _
    // Predicated region
    $region22: #{fwd.5} parent=1 // pred_check
      _
    $region23: #{fwd.5} parent=1 // pred_check_branch
      %52 = sbr.rel (0) target = $region25
    $region24: #{fwd.5} parent=1 // pred_region
      %53 = dma.done [#allocation7], 16
    $region25: #{fwd.5} parent=1 // pred_fallthru
      _
    %p55 = scmp.eq.s32.totalorder 0, 0
    // Predicated region
    $region26: #{fwd.5} parent=1 // pred_check
      %p56 = pneg %p55
    $region27: #{fwd.5} parent=1 // pred_check_branch
      %58 = sbr.rel (%p56) target = $region29
    $region28: #{fwd.5} parent=1 // pred_region
      %vm59 = vcmask 523264
      %60 = vst.msk [vmem:[#allocation2] sm:$0xff] %vm59, 0.0
      %61 = vst.msk [vmem:[#allocation2 + $0x8] sm:$0xff] %vm59, 0.0
    $region29: #{fwd.5} parent=1 // pred_fallthru
      _
    %v62 = vld [vmem:[#allocation2] sm:$0xff]
    %v63 = vld [vmem:[#allocation2 + $0x8] sm:$0xff]
    %v64 = vld [vmem:[#allocation3] sm:$0xff]
    %v65 = vld [vmem:[#allocation3 + $0x8] sm:$0xff]
    %v66 = vpack.c.bf16 %v65, %v64
    %v67 = vld [vmem:[#allocation6] sm:$0xff]
    %v68 = vld [vmem:[#allocation6 + $0x8] sm:$0xff]
    %v69 = vld [vmem:[#allocation6 + $0x10] sm:$0xff]
    %v70 = vld [vmem:[#allocation6 + $0x18] sm:$0xff]
    %v71 = vpack.c.bf16 %v68, %v67
    %v72 = vpack.c.bf16 %v70, %v69
    %vm73 = vcmask 261120
    %v75 = vsel %vm73, %v66, 0
    %77 = vmatprep.subr.bf16.mxu0 0
    %78 = vmatpush1.bf16.msra.mxu0 %v71
    %79 = vmatprep.subr.bf16.mxu0 0
    %80 = vmatpush1.bf16.msra.mxu0 %v72
    %81 = vmatprep.subr.bf16.mxu0 0
    %82 = vmatpush1.bf16.msra.mxu0 0
    %83 = vmatprep.subr.bf16.mxu0 0
    %84 = vmatpush1.bf16.msra.mxu0 0
    %85 = vmatprep.subr.bf16.mxu0 0
    %86 = vmatpush1.bf16.msra.mxu0 0
    %87 = vmatprep.subr.bf16.mxu0 0
    %88 = vmatpush1.bf16.msra.mxu0 0
    %89 = vmatprep.subr.bf16.mxu0 0
    %90 = vmatpush1.bf16.msra.mxu0 0
    %91 = vmatprep.subr.bf16.mxu0 0
    %92 = vmatpush1.bf16.msra.mxu0 0
    %93 = vmatprep.subr.bf16.mxu0 0
    %94 = vmatpush1.bf16.msra.mxu0 0
    %95 = vmatprep.subr.bf16.mxu0 0
    %96 = vmatpush1.bf16.msra.mxu0 0
    %97 = vmatprep.subr.bf16.mxu0 0
    %98 = vmatpush1.bf16.msra.mxu0 0
    %99 = vmatprep.subr.bf16.mxu0 0
    %100 = vmatpush1.bf16.msra.mxu0 0
    %101 = vmatprep.subr.bf16.mxu0 0
    %102 = vmatpush1.bf16.msra.mxu0 0
    %103 = vmatprep.subr.bf16.mxu0 0
    %104 = vmatpush1.bf16.msra.mxu0 0
    %105 = vmatprep.subr.bf16.mxu0 0
    %106 = vmatpush1.bf16.msra.mxu0 0
    %107 = vmatprep.subr.bf16.mxu0 0
    %108 = vmatpush1.bf16.msra.mxu0 0
    %109 = vmatprep.mubr.bf16.mxu0 0
    %110 = vmatmul.mubr.bf16.gmra.mrb[0].mxu0 %v75
    %v111 = vpop.f32.mrb[0].mxu0
    %v112 = vadd.f32 0.0, %v111
    %v113 = vpop.f32.mrb[0].mxu0
    %v114 = vpop.f32.mrb[0].mxu0
    %v115 = vadd.f32 0.0, %v114
    %v116 = vpop.f32.mrb[0].mxu0
    %117 = vdwg.mxu0
    %v118 = vadd.f32 %v62, %v112
    %v119 = vadd.f32 %v63, %v115
    %vm120 = vcmask 523264
    %121 = vst.msk [vmem:[#allocation2] sm:$0xff] %vm120, %v118
    %122 = vst.msk [vmem:[#allocation2 + $0x8] sm:$0xff] %vm120, %v119
    // Predicated region
    $region30: #{fwd.5} parent=1 // pred_check
      %p123 = pneg %p55
    $region31: #{fwd.5} parent=1 // pred_check_branch
      %125 = sbr.rel (%p123) target = $region33
    $region32: #{fwd.5} parent=1 // pred_region
      %v126 = vld [vmem:[#allocation2] sm:$0xff]
      %v127 = vld [vmem:[#allocation2 + $0x8] sm:$0xff]
      %v128 = vld [vmem:[#allocation8] sm:$0x1]
      %v130 = vlaneseq
      %v131 = vshrl.u32 %v130, 7
      %v132 = vsub.s32 0, %v131
      %v133 = vrot.slane %v128, %v132
      %v135 = vadd.f32 %v126, %v133
      %v136 = vadd.f32 %v127, %v133
      %137 = vst.msk [vmem:[#allocation9] sm:$0xff] %vm120, %v135
      %138 = vst.msk [vmem:[#allocation9 + $0x8] sm:$0xff] %vm120, %v136
    $region33: #{fwd.5} parent=1 // pred_fallthru
      _
    // Predicated region
    $region34: #{fwd.5} parent=1 // pred_check
      _
    $region35: #{fwd.5} parent=1 // pred_check_branch
      %140 = sbr.rel (0) target = $region37
    $region36: #{fwd.5} parent=1 // pred_region
      %s142 = ssub.s32 256, 256
      %143 = vsyncadd [#allocation5], %s142
      %s144 = sshll.u32 [#allocation9], 4
      %s145 = int_to_ptr.vmem [resolvable:$true] %s144
      %150 = dma.vmem_to_hbm [thread:$0]  %s145, 256, %s3, [#allocation5], 128, 128, 8
    $region37: #{fwd.5} parent=1 // pred_fallthru
      _
    // Predicated region
    $region38: #{fwd.5} parent=1 // pred_check
      _
    $region39: #{fwd.5} parent=1 // pred_check_branch
      %152 = sbr.rel (0) target = $region41
    $region40: #{fwd.5} parent=1 // pred_region
      %153 = dma.done [#allocation5], 256
    $region41: #{fwd.5} parent=1 // pred_fallthru
      _
    %154 = vsyncpa [#allocation4], 1
    %155 = vsyncpa [#allocation7], 1
    %156 = vsyncpa [#allocation5], 1

// kernel: fwd.4
$region0: #{fwd.4}
  #allocation0 [shape = 'u32[]', space=smem, size = 0x4, offset = 0x4, fixed_abs, tag = 'smem constant byte address 0x4 - core index']
  #allocation1 [shape = 'u32[144,128]{1,0:T(1,128)}', space=vmem, size = 0x12000, scoped, tag = 'internal scratch']
  #allocation2 [shape = 'f32[16,32]{1,0:T(8,128)}', space=vmem, size = 0x2000, scoped, tag = 'scratch operand']
  %s0 = inlined_call_operand.hbm [shape: f32[16,32], index: 0, kind: input, shape index: {}]
  %s1 = inlined_call_operand.hbm [shape: f32[32,32], index: 1, kind: input, shape index: {}]
  %s2 = inlined_call_operand.hbm [shape: f32[1,32], index: 2, kind: input, shape index: {}]
  %s3 = inlined_call_operand.hbm [shape: f32[16,32], index: 3, kind: output, shape index: {}]
  %s4 = sld [smem:[#allocation0]]
  $region42: #{fwd.4} parent=0
    _
  %s6 = ssub.s32 1, %s4
  %s7 = scalar_select 0, %s6, %s4
  $region1: #{fwd.4} parent=0
    #allocation3 [shape = 'u8[8192]{0}', space=vmem, size = 0x2000, scoped, tag = 'input window, operand 0, single buffered']
    #allocation4 [shape = 's32[1]{0}', space=sflag, size = 0x4, scoped, tag = 'scoped memory for fwd.4']
    #allocation5 [shape = 's32[1]{0}', space=sflag, size = 0x4, scoped, tag = 'scoped memory for fwd.4']
    #allocation6 [shape = 'u8[16384]{0}', space=vmem, size = 0x4000, scoped, tag = 'input window, operand 1, single buffered']
    #allocation7 [shape = 's32[1]{0}', space=sflag, size = 0x4, scoped, tag = 'scoped memory for fwd.4']
    #allocation8 [shape = 'u8[512]{0}', space=vmem, size = 0x400, scoped, tag = 'input window, operand 2, single buffered']
    #allocation9 [shape = 'u8[8192]{0}', space=vmem, size = 0x2000, scoped, tag = 'output window, operand 0, single buffered']
    %8 = vsyncpa [#allocation4], 0
    %9 = vsyncpa [#allocation7], 0
    %10 = vsyncpa [#allocation5], 0
    // Predicated region
    $region2: #{fwd.4} parent=1 // pred_check
      _
    $region3: #{fwd.4} parent=1 // pred_check_branch
      %12 = sbr.rel (0) target = $region5
    $region4: #{fwd.4} parent=1 // pred_region
      %s14 = ssub.s32 256, 256
      %15 = vsyncadd [#allocation4], %s14
      %s16 = sshll.u32 [#allocation3], 4
      %s17 = int_to_ptr.vmem [resolvable:$true] %s16
      %22 = dma.hbm_to_vmem [thread:$0]  %s0, 256, %s17, [#allocation4], 128, 128, 8
    $region5: #{fwd.4} parent=1 // pred_fallthru
      _
    // Predicated region
    $region6: #{fwd.4} parent=1 // pred_check
      _
    $region7: #{fwd.4} parent=1 // pred_check_branch
      %24 = sbr.rel (0) target = $region9
    $region8: #{fwd.4} parent=1 // pred_region
      %s26 = ssub.s32 512, 512
      %27 = vsyncadd [#allocation7], %s26
      %s28 = sshll.u32 [#allocation6], 4
      %s29 = int_to_ptr.vmem [resolvable:$true] %s28
      %34 = dma.hbm_to_vmem [thread:$0]  %s1, 512, %s29, [#allocation7], 128, 128, 8
    $region9: #{fwd.4} parent=1 // pred_fallthru
      _
    // Predicated region
    $region10: #{fwd.4} parent=1 // pred_check
      _
    $region11: #{fwd.4} parent=1 // pred_check_branch
      %36 = sbr.rel (0) target = $region13
    $region12: #{fwd.4} parent=1 // pred_region
      %s38 = ssub.s32 16, 16
      %39 = vsyncadd [#allocation7], %s38
      %s41 = sshll.u32 [#allocation8], 4
      %s42 = int_to_ptr.vmem [resolvable:$true] %s41
      %44 = dma.hbm_to_vmem [thread:$0]  %s2, 16, %s42, [#allocation7]
    $region13: #{fwd.4} parent=1 // pred_fallthru
      _
    // Predicated region
    $region14: #{fwd.4} parent=1 // pred_check
      _
    $region15: #{fwd.4} parent=1 // pred_check_branch
      %46 = sbr.rel (0) target = $region17
    $region16: #{fwd.4} parent=1 // pred_region
      %47 = dma.done [#allocation4], 256
    $region17: #{fwd.4} parent=1 // pred_fallthru
      _
    // Predicated region
    $region18: #{fwd.4} parent=1 // pred_check
      _
    $region19: #{fwd.4} parent=1 // pred_check_branch
      %49 = sbr.rel (0) target = $region21
    $region20: #{fwd.4} parent=1 // pred_region
      %50 = dma.done [#allocation7], 512
    $region21: #{fwd.4} parent=1 // pred_fallthru
      _
    // Predicated region
    $region22: #{fwd.4} parent=1 // pred_check
      _
    $region23: #{fwd.4} parent=1 // pred_check_branch
      %52 = sbr.rel (0) target = $region25
    $region24: #{fwd.4} parent=1 // pred_region
      %53 = dma.done [#allocation7], 16
    $region25: #{fwd.4} parent=1 // pred_fallthru
      _
    %p55 = scmp.eq.s32.totalorder 0, 0
    // Predicated region
    $region26: #{fwd.4} parent=1 // pred_check
      %p56 = pneg %p55
    $region27: #{fwd.4} parent=1 // pred_check_branch
      %58 = sbr.rel (%p56) target = $region29
    $region28: #{fwd.4} parent=1 // pred_region
      %vm59 = vcmask 261120
      %60 = vst.msk [vmem:[#allocation2] sm:$0xff] %vm59, 0.0
      %61 = vst.msk [vmem:[#allocation2 + $0x8] sm:$0xff] %vm59, 0.0
    $region29: #{fwd.4} parent=1 // pred_fallthru
      _
    %v62 = vld [vmem:[#allocation2] sm:$0xff]
    %v63 = vld [vmem:[#allocation2 + $0x8] sm:$0xff]
    %v64 = vld [vmem:[#allocation3] sm:$0xff]
    %v65 = vld [vmem:[#allocation3 + $0x8] sm:$0xff]
    %v66 = vpack.c.bf16 %v65, %v64
    %v67 = vld [vmem:[#allocation6] sm:$0xff]
    %v68 = vld [vmem:[#allocation6 + $0x8] sm:$0xff]
    %v69 = vld [vmem:[#allocation6 + $0x10] sm:$0xff]
    %v70 = vld [vmem:[#allocation6 + $0x18] sm:$0xff]
    %v71 = vpack.c.bf16 %v68, %v67
    %v72 = vpack.c.bf16 %v70, %v69
    %vm73 = vcmask 261120
    %v75 = vsel %vm73, %v66, 0
    %77 = vmatprep.subr.bf16.mxu0 0
    %78 = vmatpush1.bf16.msra.mxu0 %v71
    %79 = vmatprep.subr.bf16.mxu0 0
    %80 = vmatpush1.bf16.msra.mxu0 %v72
    %81 = vmatprep.subr.bf16.mxu0 0
    %82 = vmatpush1.bf16.msra.mxu0 0
    %83 = vmatprep.subr.bf16.mxu0 0
    %84 = vmatpush1.bf16.msra.mxu0 0
    %85 = vmatprep.subr.bf16.mxu0 0
    %86 = vmatpush1.bf16.msra.mxu0 0
    %87 = vmatprep.subr.bf16.mxu0 0
    %88 = vmatpush1.bf16.msra.mxu0 0
    %89 = vmatprep.subr.bf16.mxu0 0
    %90 = vmatpush1.bf16.msra.mxu0 0
    %91 = vmatprep.subr.bf16.mxu0 0
    %92 = vmatpush1.bf16.msra.mxu0 0
    %93 = vmatprep.subr.bf16.mxu0 0
    %94 = vmatpush1.bf16.msra.mxu0 0
    %95 = vmatprep.subr.bf16.mxu0 0
    %96 = vmatpush1.bf16.msra.mxu0 0
    %97 = vmatprep.subr.bf16.mxu0 0
    %98 = vmatpush1.bf16.msra.mxu0 0
    %99 = vmatprep.subr.bf16.mxu0 0
    %100 = vmatpush1.bf16.msra.mxu0 0
    %101 = vmatprep.subr.bf16.mxu0 0
    %102 = vmatpush1.bf16.msra.mxu0 0
    %103 = vmatprep.subr.bf16.mxu0 0
    %104 = vmatpush1.bf16.msra.mxu0 0
    %105 = vmatprep.subr.bf16.mxu0 0
    %106 = vmatpush1.bf16.msra.mxu0 0
    %107 = vmatprep.subr.bf16.mxu0 0
    %108 = vmatpush1.bf16.msra.mxu0 0
    %109 = vmatprep.mubr.bf16.mxu0 0
    %110 = vmatmul.mubr.bf16.gmra.mrb[0].mxu0 %v75
    %v111 = vpop.f32.mrb[0].mxu0
    %v112 = vadd.f32 0.0, %v111
    %v113 = vpop.f32.mrb[0].mxu0
    %v114 = vpop.f32.mrb[0].mxu0
    %v115 = vadd.f32 0.0, %v114
    %v116 = vpop.f32.mrb[0].mxu0
    %117 = vdwg.mxu0
    %v118 = vadd.f32 %v62, %v112
    %v119 = vadd.f32 %v63, %v115
    %120 = vst.msk [vmem:[#allocation2] sm:$0xff] %vm73, %v118
    %121 = vst.msk [vmem:[#allocation2 + $0x8] sm:$0xff] %vm73, %v119
    // Predicated region
    $region30: #{fwd.4} parent=1 // pred_check
      %p122 = pneg %p55
    $region31: #{fwd.4} parent=1 // pred_check_branch
      %124 = sbr.rel (%p122) target = $region33
    $region32: #{fwd.4} parent=1 // pred_region
      %v125 = vld [vmem:[#allocation2] sm:$0xff]
      %v126 = vld [vmem:[#allocation2 + $0x8] sm:$0xff]
      %v127 = vld [vmem:[#allocation8] sm:$0x1]
      %v129 = vlaneseq
      %v130 = vshrl.u32 %v129, 7
      %v131 = vsub.s32 0, %v130
      %v132 = vrot.slane %v127, %v131
      %v134 = vadd.f32 %v125, %v132
      %v135 = vadd.f32 %v126, %v132
      %136 = vst.msk [vmem:[#allocation9] sm:$0xff] %vm73, %v134
      %137 = vst.msk [vmem:[#allocation9 + $0x8] sm:$0xff] %vm73, %v135
    $region33: #{fwd.4} parent=1 // pred_fallthru
      _
    // Predicated region
    $region34: #{fwd.4} parent=1 // pred_check
      _
    $region35: #{fwd.4} parent=1 // pred_check_branch
      %139 = sbr.rel (0) target = $region37
    $region36: #{fwd.4} parent=1 // pred_region
      %s141 = ssub.s32 256, 256
      %142 = vsyncadd [#allocation5], %s141
      %s143 = sshll.u32 [#allocation9], 4
      %s144 = int_to_ptr.vmem [resolvable:$true] %s143
      %149 = dma.vmem_to_hbm [thread:$0]  %s144, 256, %s3, [#allocation5], 128, 128, 8
    $region37: #{fwd.4} parent=1 // pred_fallthru
      _
    // Predicated region
    $region38: #{fwd.4} parent=1 // pred_check
      _
    $region39: #{fwd.4} parent=1 // pred_check_branch
      %151 = sbr.rel (0) target = $region41
    $region40: #{fwd.4} parent=1 // pred_region
      %152 = dma.done [#allocation5], 256
    $region41: #{fwd.4} parent=1 // pred_fallthru
      _
    %153 = vsyncpa [#allocation4], 1
    %154 = vsyncpa [#allocation7], 1
    %155 = vsyncpa [#allocation5], 1

// kernel: fwd.6
$region0: #{fwd.6}
  #allocation0 [shape = 'u32[]', space=smem, size = 0x4, offset = 0x4, fixed_abs, tag = 'smem constant byte address 0x4 - core index']
  #allocation1 [shape = 'u32[144,128]{1,0:T(1,128)}', space=vmem, size = 0x12000, scoped, tag = 'internal scratch']
  %s0 = inlined_call_operand.hbm [shape: f32[2,8,32], index: 0, kind: input, shape index: {}]
  %s1 = inlined_call_operand.hbm [shape: f32[2,8,64], index: 1, kind: input, shape index: {}]
  %s2 = inlined_call_operand.hbm [shape: s32[2,1,8], index: 2, kind: input, shape index: {}]
  %s3 = inlined_call_operand.hbm [shape: f32[2,8,32], index: 3, kind: output, shape index: {0}]
  %s4 = inlined_call_operand.hbm [shape: f32[2,4,8,8], index: 4, kind: output, shape index: {1}]
  %5 = xla_tuple %s3, %s4
  %s6 = sld [smem:[#allocation0]]
  $region65: #{fwd.6} parent=0
    _
  %s8 = ssub.s32 1, %s6
  %s9 = scalar_select 0, %s8, %s6
  $region1: #{fwd.6} parent=0
    #allocation2 [shape = 'u8[8192]{0}', space=vmem, size = 0x2000, scoped, tag = 'input window, operand 0']
    #allocation3 [shape = 's32[2]{0}', space=sflag, size = 0x8, scoped, tag = 'scoped memory for fwd.6']
    #allocation4 [shape = 's32[2]{0}', space=sflag, size = 0x8, scoped, tag = 'scoped memory for fwd.6']
    #allocation5 [shape = 'u8[8192]{0}', space=vmem, size = 0x2000, scoped, tag = 'input window, operand 1']
    #allocation6 [shape = 's32[2]{0}', space=sflag, size = 0x8, scoped, tag = 'scoped memory for fwd.6']
    #allocation7 [shape = 'u8[1024]{0}', space=vmem, size = 0x400, scoped, tag = 'input window, operand 2']
    #allocation8 [shape = 'u8[8192]{0}', space=vmem, size = 0x2000, scoped, tag = 'output window, operand 0']
    #allocation9 [shape = 'u8[32768]{0}', space=vmem, size = 0x8000, scoped, tag = 'output window, operand 1']
    #allocation10 [shape = 's32[2]{0}', space=sflag, size = 0x8, scoped, tag = 'scoped memory for fwd.6']
    %10 = vsyncpa [#allocation3], 0
    %s11 = scalar_lea.sflag [#allocation3], 1
    %12 = vsyncpa %s11, 0
    %13 = vsyncpa [#allocation6], 0
    %s14 = scalar_lea.sflag [#allocation6], 1
    %15 = vsyncpa %s14, 0
    %16 = vsyncpa [#allocation4], 0
    %s17 = scalar_lea.sflag [#allocation4], 1
    %18 = vsyncpa %s17, 0
    %19 = vsyncpa [#allocation10], 0
    %s20 = scalar_lea.sflag [#allocation10], 1
    %21 = vsyncpa %s20, 0
    loop: start=0, step=1, limit=4
    $region2: #{fwd.6} parent=1 // loop_pre_header
      _
    $region3: #{fwd.6} parent=1 // loop_header
      %s23 = sphi 0, %s27
      %p24 = scmp.ge.s32.totalorder %s23, 4
      %s30 = sphi 0, %s42
      %s31 = sphi 0, %s38
      %s32 = sphi 0, %s30
      %s33 = sphi 0, %s31
      %s34 = sphi 0, %s32
      %s35 = sphi 0, %s33
      %s47 = sphi 0, %s49
      %s50 = sphi 0, %s47
      %s51 = sphi 0, %s50
      %s67 = sphi 0, %s51
      %s73 = sphi 0, %s75
      %s76 = sphi 0, %s73
      %s77 = sphi 0, %s76
      %s93 = sphi 0, %s77
      %s99 = sphi 0, %s101
      %s102 = sphi 0, %s99
      %s103 = sphi 0, %s102
      %s119 = sphi 0, %s103
      %s127 = sphi 0, %s129
      %s130 = sphi 0, %s127
      %s131 = sphi 0, %s130
      %s147 = sphi 0, %s131
      %s155 = sphi 0, %s157
      %s158 = sphi 0, %s155
      %s159 = sphi 0, %s158
      %s175 = sphi 0, %s159
    $region4: #{fwd.6} parent=1 // loop_header_branch
      %26 = sbr.rel (%p24) target = $region8
    $region5: #{fwd.6} parent=1 // loop_body
      %s28 = ssub.s32 %s23, 1
      %s29 = ssub.s32 %s23, 2
      %s36 = sadd.s32 1, %s31
      %p37 = scmp.ge.s32.totalorder %s36, 1
      %s38 = scalar_select %p37, 0, %s36
      %s39 = sadd.s32 1, %s30
      %s40 = scalar_select %p37, %s39, %s30
      %p41 = scmp.ge.s32.totalorder %s40, 2
      %s42 = scalar_select %p41, 0, %s40
      %s43 = ssub.s32 %s30, %s42
      %s44 = ssub.s32 %s31, %s38
      %s45 = sor.u32 %s43, %s44
      %p46 = scmp.eq.s32.totalorder %s45, 0
      %s48 = sadd.s32 %s47, 1
      %s49 = scalar_select %p46, %s47, %s48
      %p52 = pneg %p46
      %p53 = scmp.eq.s32.totalorder %s23, 1
      %p54 = por %p52, %p53
      %p55 = scmp.ne.s32.totalorder %s47, %s50
      %p56 = scmp.eq.s32.totalorder %s23, 0
      %p57 = por %p55, %p56
      %p58 = scmp.ne.s32.totalorder %s47, %s50
      %p59 = scmp.eq.s32.totalorder %s28, 1
      %p60 = por %p58, %p59
      %p61 = scmp.ne.s32.totalorder %s50, %s51
      %p62 = scmp.eq.s32.totalorder %s28, 0
      %p63 = por %p61, %p62
      %p64 = scmp.ne.s32.totalorder %s50, %s51
      %p65 = scmp.eq.s32.totalorder %s29, 1
      %p66 = por %p64, %p65
      %p68 = scmp.ne.s32.totalorder %s51, %s67
      %p69 = scmp.eq.s32.totalorder %s29, 0
      %p70 = por %p68, %p69
      %s71 = ssub.s32 %s30, %s42
      %p72 = scmp.eq.s32.totalorder %s71, 0
      %s74 = sadd.s32 %s73, 1
      %s75 = scalar_select %p72, %s73, %s74
      %p78 = pneg %p72
      %p79 = scmp.eq.s32.totalorder %s23, 1
      %p80 = por %p78, %p79
      %p81 = scmp.ne.s32.totalorder %s73, %s76
      %p82 = scmp.eq.s32.totalorder %s23, 0
      %p83 = por %p81, %p82
      %p84 = scmp.ne.s32.totalorder %s73, %s76
      %p85 = scmp.eq.s32.totalorder %s28, 1
      %p86 = por %p84, %p85
      %p87 = scmp.ne.s32.totalorder %s76, %s77
      %p88 = scmp.eq.s32.totalorder %s28, 0
      %p89 = por %p87, %p88
      %p90 = scmp.ne.s32.totalorder %s76, %s77
      %p91 = scmp.eq.s32.totalorder %s29, 1
      %p92 = por %p90, %p91
      %p94 = scmp.ne.s32.totalorder %s77, %s93
      %p95 = scmp.eq.s32.totalorder %s29, 0
      %p96 = por %p94, %p95
      %s97 = ssub.s32 %s30, %s42
      %p98 = scmp.eq.s32.totalorder %s97, 0
      %s100 = sadd.s32 %s99, 1
      %s101 = scalar_select %p98, %s99, %s100
      %p104 = pneg %p98
      %p105 = scmp.eq.s32.totalorder %s23, 1
      %p106 = por %p104, %p105
      %p107 = scmp.ne.s32.totalorder %s99, %s102
      %p108 = scmp.eq.s32.totalorder %s23, 0
      %p109 = por %p107, %p108
      %p110 = scmp.ne.s32.totalorder %s99, %s102
      %p111 = scmp.eq.s32.totalorder %s28, 1
      %p112 = por %p110, %p111
      %p113 = scmp.ne.s32.totalorder %s102, %s103
      %p114 = scmp.eq.s32.totalorder %s28, 0
      %p115 = por %p113, %p114
      %p116 = scmp.ne.s32.totalorder %s102, %s103
      %p117 = scmp.eq.s32.totalorder %s29, 1
      %p118 = por %p116, %p117
      %p120 = scmp.ne.s32.totalorder %s103, %s119
      %p121 = scmp.eq.s32.totalorder %s29, 0
      %p122 = por %p120, %p121
      %s123 = ssub.s32 %s30, %s42
      %s124 = ssub.s32 %s31, %s38
      %s125 = sor.u32 %s123, %s124
      %p126 = scmp.eq.s32.totalorder %s125, 0
      %s128 = sadd.s32 %s127, 1
      %s129 = scalar_select %p126, %s127, %s128
      %p132 = pneg %p126
      %p133 = scmp.eq.s32.totalorder %s23, 1
      %p134 = por %p132, %p133
      %p135 = scmp.ne.s32.totalorder %s127, %s130
      %p136 = scmp.eq.s32.totalorder %s23, 0
      %p137 = por %p135, %p136
      %p138 = scmp.ne.s32.totalorder %s127, %s130
      %p139 = scmp.eq.s32.totalorder %s28, 1
      %p140 = por %p138, %p139
      %p141 = scmp.ne.s32.totalorder %s130, %s131
      %p142 = scmp.eq.s32.totalorder %s28, 0
      %p143 = por %p141, %p142
      %p144 = scmp.ne.s32.totalorder %s130, %s131
      %p145 = scmp.eq.s32.totalorder %s29, 1
      %p146 = por %p144, %p145
      %p148 = scmp.ne.s32.totalorder %s131, %s147
      %p149 = scmp.eq.s32.totalorder %s29, 0
      %p150 = por %p148, %p149
      %s151 = ssub.s32 %s30, %s42
      %s152 = ssub.s32 %s31, %s38
      %s153 = sor.u32 %s151, %s152
      %p154 = scmp.eq.s32.totalorder %s153, 0
      %s156 = sadd.s32 %s155, 1
      %s157 = scalar_select %p154, %s155, %s156
      %p160 = pneg %p154
      %p161 = scmp.eq.s32.totalorder %s23, 1
      %p162 = por %p160, %p161
      %p163 = scmp.ne.s32.totalorder %s155, %s158
      %p164 = scmp.eq.s32.totalorder %s23, 0
      %p165 = por %p163, %p164
      %p166 = scmp.ne.s32.totalorder %s155, %s158
      %p167 = scmp.eq.s32.totalorder %s28, 1
      %p168 = por %p166, %p167
      %p169 = scmp.ne.s32.totalorder %s158, %s159
      %p170 = scmp.eq.s32.totalorder %s28, 0
      %p171 = por %p169, %p170
      %p172 = scmp.ne.s32.totalorder %s158, %s159
      %p173 = scmp.eq.s32.totalorder %s29, 1
      %p174 = por %p172, %p173
      %p176 = scmp.ne.s32.totalorder %s159, %s175
      %p177 = scmp.eq.s32.totalorder %s29, 0
      %p178 = por %p176, %p177
      %p179 = scmp.le.s32.totalorder 1, %s23
      %p180 = scmp.lt.s32.totalorder %s23, 3
      %p181 = pnand %p179, %p180
      %p182 = pneg %p181
      // Predicated region
      $region9: #{fwd.6} parent=5 // pred_check
        _
      $region10: #{fwd.6} parent=5 // pred_check_branch
        %184 = sbr.rel (%p181) target = $region12
      $region11: #{fwd.6} parent=5 // pred_region
        %s185 = ssub.s32 %s23, 1
      $region12: #{fwd.6} parent=5 // pred_fallthru
        _
      %p186 = scmp.lt.s32.totalorder %s23, 2
      // Predicated region
      $region13: #{fwd.6} parent=5 // pred_check
        %p187 = pneg %p186
      $region14: #{fwd.6} parent=5 // pred_check_branch
        %189 = sbr.rel (%p187) target = $region16
      $region15: #{fwd.6} parent=5 // pred_region
        // Predicated region
        $region17: #{fwd.6} parent=15 // pred_check
          %p190 = pneg %p57
        $region18: #{fwd.6} parent=15 // pred_check_branch
          %192 = sbr.rel (%p190) target = $region20
        $region19: #{fwd.6} parent=15 // pred_region
          %s193 = sand.u32 %s47, 1
          %s194 = scalar_lea.sflag [#allocation3], %s193
          %s195 = sand.u32 %s47, 1
          %s196 = smul.addr %s195, 8
          %s197 = scalar_lea.vmem [#allocation2], %s196
          %s199 = ssub.s32 128, 128
          %200 = vsyncadd %s194, %s199
          %s201 = sadd.s32 %s31, %s30
          %s202 = smul.addr %s201, 128
          %s203 = scalar_lea.hbm %s0, %s202
          %s205 = sshll.u32 %s197, 4
          %s206 = int_to_ptr.vmem [resolvable:$true] %s205
          %208 = dma.hbm_to_vmem [thread:$0]  %s203, 128, %s206, %s194
        $region20: #{fwd.6} parent=15 // pred_fallthru
          _
        // Predicated region
        $region21: #{fwd.6} parent=15 // pred_check
          %p209 = pneg %p83
        $region22: #{fwd.6} parent=15 // pred_check_branch
          %211 = sbr.rel (%p209) target = $region24
        $region23: #{fwd.6} parent=15 // pred_region
          %s212 = sand.u32 %s23, 1
          %s213 = scalar_lea.sflag [#allocation6], %s212
          %s214 = sand.u32 %s73, 1
          %s215 = smul.addr %s214, 8
          %s216 = scalar_lea.vmem [#allocation5], %s215
          %s218 = ssub.s32 128, 128
          %219 = vsyncadd %s213, %s218
          %s220 = smul.addr %s30, 128
          %s221 = scalar_lea.hbm %s1, %s220
          %s223 = sshll.u32 %s216, 4
          %s224 = int_to_ptr.vmem [resolvable:$true] %s223
          %226 = dma.hbm_to_vmem [thread:$0]  %s221, 128, %s224, %s213
        $region24: #{fwd.6} parent=15 // pred_fallthru
          _
        // Predicated region
        $region25: #{fwd.6} parent=15 // pred_check
          %p227 = pneg %p109
        $region26: #{fwd.6} parent=15 // pred_check_branch
          %229 = sbr.rel (%p227) target = $region28
        $region27: #{fwd.6} parent=15 // pred_region
          %s230 = sand.u32 %s23, 1
          %s231 = scalar_lea.sflag [#allocation6], %s230
          %s232 = sand.u32 %s99, 1
          %s233 = scalar_lea.vmem [#allocation7], %s232
          %s235 = ssub.s32 16, 16
          %236 = vsyncadd %s231, %s235
          %s237 = smul.addr %s30, 16
          %s238 = scalar_lea.hbm %s2, %s237
          %s240 = sshll.u32 %s233, 4
          %s241 = int_to_ptr.vmem [resolvable:$true] %s240
          %243 = dma.hbm_to_vmem [thread:$0]  %s238, 16, %s241, %s231
        $region28: #{fwd.6} parent=15 // pred_fallthru
          _
      $region16: #{fwd.6} parent=5 // pred_fallthru
        _
      %p244 = scmp.le.s32.totalorder 1, %s23
      %p245 = scmp.lt.s32.totalorder %s23, 3
      %p246 = pnand %p244, %p245
      %p247 = pneg %p246
      // Predicated region
      $region29: #{fwd.6} parent=5 // pred_check
        _
      $region30: #{fwd.6} parent=5 // pred_check_branch
        %249 = sbr.rel (%p246) target = $region32
      $region31: #{fwd.6} parent=5 // pred_region
        %s250 = ssub.s32 %s23, 1
        %s251 = sand.u32 %s50, 1
        %s252 = scalar_lea.sflag [#allocation3], %s251
        %s253 = sand.u32 %s50, 1
        %s254 = smul.addr %s253, 8
        %s255 = scalar_lea.vmem [#allocation2], %s254
        // Predicated region
        $region33: #{fwd.6} parent=31 // pred_check
          %p256 = pneg %p63
        $region34: #{fwd.6} parent=31 // pred_check_branch
          %258 = sbr.rel (%p256) target = $region36
        $region35: #{fwd.6} parent=31 // pred_region
          %259 = dma.done %s252, 128
        $region36: #{fwd.6} parent=31 // pred_fallthru
          _
        %s260 = sand.u32 %s28, 1
        %s261 = scalar_lea.sflag [#allocation6], %s260
        %s262 = sand.u32 %s76, 1
        %s263 = smul.addr %s262, 8
        %s264 = scalar_lea.vmem [#allocation5], %s263
        // Predicated region
        $region37: #{fwd.6} parent=31 // pred_check
          %p265 = pneg %p89
        $region38: #{fwd.6} parent=31 // pred_check_branch
          %267 = sbr.rel (%p265) target = $region40
        $region39: #{fwd.6} parent=31 // pred_region
          %268 = dma.done %s261, 128
        $region40: #{fwd.6} parent=31 // pred_fallthru
          _
        %s269 = sand.u32 %s28, 1
        %s270 = scalar_lea.sflag [#allocation6], %s269
        %s271 = sand.u32 %s102, 1
        %s272 = scalar_lea.vmem [#allocation7], %s271
        // Predicated region
        $region41: #{fwd.6} parent=31 // pred_check
          %p273 = pneg %p115
        $region42: #{fwd.6} parent=31 // pred_check_branch
          %275 = sbr.rel (%p273) target = $region44
        $region43: #{fwd.6} parent=31 // pred_region
          %276 = dma.done %s270, 16
        $region44: #{fwd.6} parent=31 // pred_fallthru
          _
        %s277 = sand.u32 %s50, 1
        %s278 = scalar_lea.sflag [#allocation3], %s277
        %s279 = sand.u32 %s50, 1
        %s280 = smul.addr %s279, 8
        %s281 = scalar_lea.vmem [#allocation2], %s280
        %p282 = pneg %p63
        %p283 = pneg %p60
        %s284 = sand.u32 %s28, 1
        %s285 = scalar_lea.sflag [#allocation6], %s284
        %s286 = sand.u32 %s76, 1
        %s287 = smul.addr %s286, 8
        %s288 = scalar_lea.vmem [#allocation5], %s287
        %p289 = pneg %p89
        %p290 = pneg %p86
        %s291 = sand.u32 %s28, 1
        %s292 = scalar_lea.sflag [#allocation6], %s291
        %s293 = sand.u32 %s102, 1
        %s294 = scalar_lea.vmem [#allocation7], %s293
        %p295 = pneg %p115
        %p296 = pneg %p112
        %p297 = pneg %p143
        %p298 = pneg %p140
        %s299 = sand.u32 %s130, 1
        %s300 = scalar_lea.sflag [#allocation4], %s299
        %s301 = sand.u32 %s130, 1
        %s302 = smul.addr %s301, 8
        %s303 = scalar_lea.vmem [#allocation8], %s302
        %p304 = pneg %p171
        %p305 = pneg %p168
        %s306 = sand.u32 %s158, 1
        %s307 = scalar_lea.sflag [#allocation10], %s306
        %s308 = sand.u32 %s158, 1
        %s309 = smul.addr %s308, 32
        %s310 = scalar_lea.vmem [#allocation9], %s309
        %v312 = vld [vmem:[%s255] sm:$0xff]
        %v313 = vmul.f32 %v312, 0.35355338
        %v314 = vpack.c.bf16 %v313, %v313
        %v315 = vld [vmem:[%s264] sm:$0xff]
        %v316 = vpack.c.bf16 %v315, %v315
        %v317 = vld [vmem:[%s272] sm:$0x1]
        %vm318 = vcmp.ne.s32.totalorder %v317, 0
        %v319 = vsel %vm318, 1, 0
        %v320 = vlaneseq
        %v321 = vshrl.u32 %v320, 7
        %v322 = vsub.s32 0, %v321
        %v323 = vrot.slane %v319, %v322
        %vm324 = vcmp.eq.s32.totalorder %v323, 1
        %vm325 = vcmask 64512
        %v327 = vsel %vm325, %v314, 0
        %v330 = vsel %vm325, %v316, 0
        %332 = vmatprep.subr.bf16.mxu0 0
        %333 = vmatpush1.bf16.xpose.msra.mxu0 %v330
        %334 = vmatprep.subr.bf16.mxu0 0
        %335 = vmatpush1.bf16.xpose.msra.mxu0 0
        %336 = vmatprep.subr.bf16.mxu0 0
        %337 = vmatpush1.bf16.xpose.msra.mxu0 0
        %338 = vmatprep.subr.bf16.mxu0 0
        %339 = vmatpush1.bf16.xpose.msra.mxu0 0
        %340 = vmatprep.subr.bf16.mxu0 0
        %341 = vmatpush1.bf16.xpose.msra.mxu0 0
        %342 = vmatprep.subr.bf16.mxu0 0
        %343 = vmatpush1.bf16.xpose.msra.mxu0 0
        %344 = vmatprep.subr.bf16.mxu0 0
        %345 = vmatpush1.bf16.xpose.msra.mxu0 0
        %346 = vmatprep.subr.bf16.mxu0 0
        %347 = vmatpush1.bf16.xpose.msra.mxu0 0
        %348 = vmatprep.subr.bf16.mxu0 0
        %349 = vmatpush1.bf16.xpose.msra.mxu0 0
        %350 = vmatprep.subr.bf16.mxu0 0
        %351 = vmatpush1.bf16.xpose.msra.mxu0 0
        %352 = vmatprep.subr.bf16.mxu0 0
        %353 = vmatpush1.bf16.xpose.msra.mxu0 0
        %354 = vmatprep.subr.bf16.mxu0 0
        %355 = vmatpush1.bf16.xpose.msra.mxu0 0
        %356 = vmatprep.subr.bf16.mxu0 0
        %357 = vmatpush1.bf16.xpose.msra.mxu0 0
        %358 = vmatprep.subr.bf16.mxu0 0
        %359 = vmatpush1.bf16.xpose.msra.mxu0 0
        %360 = vmatprep.subr.bf16.mxu0 0
        %361 = vmatpush1.bf16.xpose.msra.mxu0 0
        %362 = vmatprep.subr.bf16.mxu0 0
        %363 = vmatpush1.bf16.xpose.msra.mxu0 0
        %364 = vmatprep.mubr.bf16.mxu0 0
        %365 = vmatmul.mubr.bf16.gmra.mrb[0].mxu0 %v327
        %v366 = vpop.f32.mrb[0].mxu0
        %v367 = vadd.f32 0.0, %v366
        %v368 = vpop.f32.mrb[0].mxu0
        %v369 = vpop.f32.mrb[0].mxu0
        %v370 = vpop.f32.mrb[0].mxu0
        %371 = vdwg.mxu0
        %v372 = vsel %vm324, %v367, -1e+09
        %v373 = vsel %vm325, %v372, -inf
        %374 = vmax.xlane.f32.xlu0 %v373
        %v375 = vpop.xlane.xlu0 %374
        %v376 = vsub.f32 %v372, %v375
        %v377 = vmul.f32 %v376, 1.442695
        %v378 = vpow.pop %v377
        %v379 = vsel %vm325, %v378, 0.0
        %380 = vadd.xlane.f32.xlu0 %v379
        %v381 = vpop.xlane.xlu0 %380
        %v382 = vrcp.pop %v381
        %v383 = vmul.f32 %v378, %v382
        %384 = vst.msk [vmem:[%s310] sm:$0xff] %vm325, %v383
        %v385 = vpack.c.bf16 %v383, %v383
        %387 = vrot.lane.b32.xlu0 %v316, 96
        %v388 = vpop.permute.xlu0 %387
        %v390 = vsel %vm325, %v385, 0
        %vm392 = vcmask 1043456
        %v394 = vsel %vm392, %v388, 0
        %396 = vmatprep.subr.bf16.mxu0 0
        %397 = vmatpush1.bf16.msra.mxu0 %v394
        %398 = vmatprep.subr.bf16.mxu0 0
        %399 = vmatpush1.bf16.msra.mxu0 0
        %400 = vmatprep.subr.bf16.mxu0 0
        %401 = vmatpush1.bf16.msra.mxu0 0
        %402 = vmatprep.subr.bf16.mxu0 0
        %403 = vmatpush1.bf16.msra.mxu0 0
        %404 = vmatprep.subr.bf16.mxu0 0
        %405 = vmatpush1.bf16.msra.mxu0 0
        %406 = vmatprep.subr.bf16.mxu0 0
        %407 = vmatpush1.bf16.msra.mxu0 0
        %408 = vmatprep.subr.bf16.mxu0 0
        %409 = vmatpush1.bf16.msra.mxu0 0
        %410 = vmatprep.subr.bf16.mxu0 0
        %411 = vmatpush1.bf16.msra.mxu0 0
        %412 = vmatprep.subr.bf16.mxu0 0
        %413 = vmatpush1.bf16.msra.mxu0 0
        %414 = vmatprep.subr.bf16.mxu0 0
        %415 = vmatpush1.bf16.msra.mxu0 0
        %416 = vmatprep.subr.bf16.mxu0 0
        %417 = vmatpush1.bf16.msra.mxu0 0
        %418 = vmatprep.subr.bf16.mxu0 0
        %419 = vmatpush1.bf16.msra.mxu0 0
        %420 = vmatprep.subr.bf16.mxu0 0
        %421 = vmatpush1.bf16.msra.mxu0 0
        %422 = vmatprep.subr.bf16.mxu0 0
        %423 = vmatpush1.bf16.msra.mxu0 0
        %424 = vmatprep.subr.bf16.mxu0 0
        %425 = vmatpush1.bf16.msra.mxu0 0
        %426 = vmatprep.subr.bf16.mxu0 0
        %427 = vmatpush1.bf16.msra.mxu0 0
        %428 = vmatprep.mubr.bf16.mxu0 0
        %429 = vmatmul.mubr.bf16.gmra.mrb[0].mxu0 %v390
        %v430 = vpop.f32.mrb[0].mxu0
        %v431 = vadd.f32 0.0, %v430
        %v432 = vpop.f32.mrb[0].mxu0
        %v433 = vpop.f32.mrb[0].mxu0
        %v434 = vpop.f32.mrb[0].mxu0
        %435 = vdwg.mxu0
        %436 = vst.msk [vmem:[%s303] sm:$0xff] %vm325, %v431
        %438 = vrot.lane.b32.xlu0 %v314, 120
        %v439 = vpop.permute.xlu0 %438
        %440 = vrot.lane.b32.xlu0 %v316, 120
        %v441 = vpop.permute.xlu0 %440
        %v443 = vsel %vm325, %v439, 0
        %v446 = vsel %vm325, %v441, 0
        %448 = vmatprep.subr.bf16.mxu0 0
        %449 = vmatpush1.bf16.xpose.msra.mxu0 %v446
        %450 = vmatprep.subr.bf16.mxu0 0
        %451 = vmatpush1.bf16.xpose.msra.mxu0 0
        %452 = vmatprep.subr.bf16.mxu0 0
        %453 = vmatpush1.bf16.xpose.msra.mxu0 0
        %454 = vmatprep.subr.bf16.mxu0 0
        %455 = vmatpush1.bf16.xpose.msra.mxu0 0
        %456 = vmatprep.subr.bf16.mxu0 0
        %457 = vmatpush1.bf16.xpose.msra.mxu0 0
        %458 = vmatprep.subr.bf16.mxu0 0
        %459 = vmatpush1.bf16.xpose.msra.mxu0 0
        %460 = vmatprep.subr.bf16.mxu0 0
        %461 = vmatpush1.bf16.xpose.msra.mxu0 0
        %462 = vmatprep.subr.bf16.mxu0 0
        %463 = vmatpush1.bf16.xpose.msra.mxu0 0
        %464 = vmatprep.subr.bf16.mxu0 0
        %465 = vmatpush1.bf16.xpose.msra.mxu0 0
        %466 = vmatprep.subr.bf16.mxu0 0
        %467 = vmatpush1.bf16.xpose.msra.mxu0 0
        %468 = vmatprep.subr.bf16.mxu0 0
        %469 = vmatpush1.bf16.xpose.msra.mxu0 0
        %470 = vmatprep.subr.bf16.mxu0 0
        %471 = vmatpush1.bf16.xpose.msra.mxu0 0
        %472 = vmatprep.subr.bf16.mxu0 0
        %473 = vmatpush1.bf16.xpose.msra.mxu0 0
        %474 = vmatprep.subr.bf16.mxu0 0
        %475 = vmatpush1.bf16.xpose.msra.mxu0 0
        %476 = vmatprep.subr.bf16.mxu0 0
        %477 = vmatpush1.bf16.xpose.msra.mxu0 0
        %478 = vmatprep.subr.bf16.mxu0 0
        %479 = vmatpush1.bf16.xpose.msra.mxu0 0
        %480 = vmatprep.mubr.bf16.mxu0 0
        %481 = vmatmul.mubr.bf16.gmra.mrb[0].mxu0 %v443
        %v482 = vpop.f32.mrb[0].mxu0
        %v483 = vadd.f32 0.0, %v482
        %v484 = vpop.f32.mrb[0].mxu0
        %v485 = vpop.f32.mrb[0].mxu0
        %v486 = vpop.f32.mrb[0].mxu0
        %487 = vdwg.mxu0
        %v488 = vsel %vm324, %v483, -1e+09
        %v489 = vsel %vm325, %v488, -inf
        %490 = vmax.xlane.f32.xlu0 %v489
        %v491 = vpop.xlane.xlu0 %490
        %v492 = vsub.f32 %v488, %v491
        %v493 = vmul.f32 %v492, 1.442695
        %v494 = vpow.pop %v493
        %v495 = vsel %vm325, %v494, 0.0
        %496 = vadd.xlane.f32.xlu0 %v495
        %v497 = vpop.xlane.xlu0 %496
        %v498 = vrcp.pop %v497
        %v499 = vmul.f32 %v494, %v498
        %s500 = scalar_lea.vmem %s310, 8 [#allocation9]
        %501 = vst.msk [vmem:[%s500] sm:$0xff] %vm325, %v499
        %v502 = vpack.c.bf16 %v499, %v499
        %503 = vrot.lane.b32.xlu0 %v316, 88
        %v504 = vpop.permute.xlu0 %503
        %v506 = vsel %vm325, %v502, 0
        %v509 = vsel %vm392, %v504, 0
        %511 = vmatprep.subr.bf16.mxu0 0
        %512 = vmatpush1.bf16.msra.mxu0 %v509
        %513 = vmatprep.subr.bf16.mxu0 0
        %514 = vmatpush1.bf16.msra.mxu0 0
        %515 = vmatprep.subr.bf16.mxu0 0
        %516 = vmatpush1.bf16.msra.mxu0 0
        %517 = vmatprep.subr.bf16.mxu0 0
        %518 = vmatpush1.bf16.msra.mxu0 0
        %519 = vmatprep.subr.bf16.mxu0 0
        %520 = vmatpush1.bf16.msra.mxu0 0
        %521 = vmatprep.subr.bf16.mxu0 0
        %522 = vmatpush1.bf16.msra.mxu0 0
        %523 = vmatprep.subr.bf16.mxu0 0
        %524 = vmatpush1.bf16.msra.mxu0 0
        %525 = vmatprep.subr.bf16.mxu0 0
        %526 = vmatpush1.bf16.msra.mxu0 0
        %527 = vmatprep.subr.bf16.mxu0 0
        %528 = vmatpush1.bf16.msra.mxu0 0
        %529 = vmatprep.subr.bf16.mxu0 0
        %530 = vmatpush1.bf16.msra.mxu0 0
        %531 = vmatprep.subr.bf16.mxu0 0
        %532 = vmatpush1.bf16.msra.mxu0 0
        %533 = vmatprep.subr.bf16.mxu0 0
        %534 = vmatpush1.bf16.msra.mxu0 0
        %535 = vmatprep.subr.bf16.mxu0 0
        %536 = vmatpush1.bf16.msra.mxu0 0
        %537 = vmatprep.subr.bf16.mxu0 0
        %538 = vmatpush1.bf16.msra.mxu0 0
        %539 = vmatprep.subr.bf16.mxu0 0
        %540 = vmatpush1.bf16.msra.mxu0 0
        %541 = vmatprep.subr.bf16.mxu0 0
        %542 = vmatpush1.bf16.msra.mxu0 0
        %543 = vmatprep.mubr.bf16.mxu0 0
        %544 = vmatmul.mubr.bf16.gmra.mrb[0].mxu0 %v506
        %v545 = vpop.f32.mrb[0].mxu0
        %v546 = vadd.f32 0.0, %v545
        %v547 = vpop.f32.mrb[0].mxu0
        %v548 = vpop.f32.mrb[0].mxu0
        %v549 = vpop.f32.mrb[0].mxu0
        %550 = vdwg.mxu0
        %552 = vrot.lane.b32.xlu0 %v546, 8
        %v553 = vpop.permute.xlu0 %552
        %vm555 = vcmask 130112
        %556 = vst.msk [vmem:[%s303] sm:$0xff] %vm555, %v553
        %557 = vrot.lane.b32.xlu0 %v314, 112
        %v558 = vpop.permute.xlu0 %557
        %559 = vrot.lane.b32.xlu0 %v316, 112
        %v560 = vpop.permute.xlu0 %559
        %v562 = vsel %vm325, %v558, 0
        %v565 = vsel %vm325, %v560, 0
        %567 = vmatprep.subr.bf16.mxu0 0
        %568 = vmatpush1.bf16.xpose.msra.mxu0 %v565
        %569 = vmatprep.subr.bf16.mxu0 0
        %570 = vmatpush1.bf16.xpose.msra.mxu0 0
        %571 = vmatprep.subr.bf16.mxu0 0
        %572 = vmatpush1.bf16.xpose.msra.mxu0 0
        %573 = vmatprep.subr.bf16.mxu0 0
        %574 = vmatpush1.bf16.xpose.msra.mxu0 0
        %575 = vmatprep.subr.bf16.mxu0 0
        %576 = vmatpush1.bf16.xpose.msra.mxu0 0
        %577 = vmatprep.subr.bf16.mxu0 0
        %578 = vmatpush1.bf16.xpose.msra.mxu0 0
        %579 = vmatprep.subr.bf16.mxu0 0
        %580 = vmatpush1.bf16.xpose.msra.mxu0 0
        %581 = vmatprep.subr.bf16.mxu0 0
        %582 = vmatpush1.bf16.xpose.msra.mxu0 0
        %583 = vmatprep.subr.bf16.mxu0 0
        %584 = vmatpush1.bf16.xpose.msra.mxu0 0
        %585 = vmatprep.subr.bf16.mxu0 0
        %586 = vmatpush1.bf16.xpose.msra.mxu0 0
        %587 = vmatprep.subr.bf16.mxu0 0
        %588 = vmatpush1.bf16.xpose.msra.mxu0 0
        %589 = vmatprep.subr.bf16.mxu0 0
        %590 = vmatpush1.bf16.xpose.msra.mxu0 0
        %591 = vmatprep.subr.bf16.mxu0 0
        %592 = vmatpush1.bf16.xpose.msra.mxu0 0
        %593 = vmatprep.subr.bf16.mxu0 0
        %594 = vmatpush1.bf16.xpose.msra.mxu0 0
        %595 = vmatprep.subr.bf16.mxu0 0
        %596 = vmatpush1.bf16.xpose.msra.mxu0 0
        %597 = vmatprep.subr.bf16.mxu0 0
        %598 = vmatpush1.bf16.xpose.msra.mxu0 0
        %599 = vmatprep.mubr.bf16.mxu0 0
        %600 = vmatmul.mubr.bf16.gmra.mrb[0].mxu0 %v562
        %v601 = vpop.f32.mrb[0].mxu0
        %v602 = vadd.f32 0.0, %v601
        %v603 = vpop.f32.mrb[0].mxu0
        %v604 = vpop.f32.mrb[0].mxu0
        %v605 = vpop.f32.mrb[0].mxu0
        %606 = vdwg.mxu0
        %v607 = vsel %vm324, %v602, -1e+09
        %v608 = vsel %vm325, %v607, -inf
        %609 = vmax.xlane.f32.xlu0 %v608
        %v610 = vpop.xlane.xlu0 %609
        %v611 = vsub.f32 %v607, %v610
        %v612 = vmul.f32 %v611, 1.442695
        %v613 = vpow.pop %v612
        %v614 = vsel %vm325, %v613, 0.0
        %615 = vadd.xlane.f32.xlu0 %v614
        %v616 = vpop.xlane.xlu0 %615
        %v617 = vrcp.pop %v616
        %v618 = vmul.f32 %v613, %v617
        %s619 = scalar_lea.vmem %s310, 16 [#allocation9]
        %620 = vst.msk [vmem:[%s619] sm:$0xff] %vm325, %v618
        %v621 = vpack.c.bf16 %v618, %v618
        %622 = vrot.lane.b32.xlu0 %v316, 80
        %v623 = vpop.permute.xlu0 %622
        %v625 = vsel %vm325, %v621, 0
        %v628 = vsel %vm392, %v623, 0
        %630 = vmatprep.subr.bf16.mxu0 0
        %631 = vmatpush1.bf16.msra.mxu0 %v628
        %632 = vmatprep.subr.bf16.mxu0 0
        %633 = vmatpush1.bf16.msra.mxu0 0
        %634 = vmatprep.subr.bf16.mxu0 0
        %635 = vmatpush1.bf16.msra.mxu0 0
        %636 = vmatprep.subr.bf16.mxu0 0
        %637 = vmatpush1.bf16.msra.mxu0 0
        %638 = vmatprep.subr.bf16.mxu0 0
        %639 = vmatpush1.bf16.msra.mxu0 0
        %640 = vmatprep.subr.bf16.mxu0 0
        %641 = vmatpush1.bf16.msra.mxu0 0
        %642 = vmatprep.subr.bf16.mxu0 0
        %643 = vmatpush1.bf16.msra.mxu0 0
        %644 = vmatprep.subr.bf16.mxu0 0
        %645 = vmatpush1.bf16.msra.mxu0 0
        %646 = vmatprep.subr.bf16.mxu0 0
        %647 = vmatpush1.bf16.msra.mxu0 0
        %648 = vmatprep.subr.bf16.mxu0 0
        %649 = vmatpush1.bf16.msra.mxu0 0
        %650 = vmatprep.subr.bf16.mxu0 0
        %651 = vmatpush1.bf16.msra.mxu0 0
        %652 = vmatprep.subr.bf16.mxu0 0
        %653 = vmatpush1.bf16.msra.mxu0 0
        %654 = vmatprep.subr.bf16.mxu0 0
        %655 = vmatpush1.bf16.msra.mxu0 0
        %656 = vmatprep.subr.bf16.mxu0 0
        %657 = vmatpush1.bf16.msra.mxu0 0
        %658 = vmatprep.subr.bf16.mxu0 0
        %659 = vmatpush1.bf16.msra.mxu0 0
        %660 = vmatprep.subr.bf16.mxu0 0
        %661 = vmatpush1.bf16.msra.mxu0 0
        %662 = vmatprep.mubr.bf16.mxu0 0
        %663 = vmatmul.mubr.bf16.gmra.mrb[0].mxu0 %v625
        %v664 = vpop.f32.mrb[0].mxu0
        %v665 = vadd.f32 0.0, %v664
        %v666 = vpop.f32.mrb[0].mxu0
        %v667 = vpop.f32.mrb[0].mxu0
        %v668 = vpop.f32.mrb[0].mxu0
        %669 = vdwg.mxu0
        %671 = vrot.lane.b32.xlu0 %v665, 16
        %v672 = vpop.permute.xlu0 %671
        %vm674 = vcmask 195712
        %675 = vst.msk [vmem:[%s303] sm:$0xff] %vm674, %v672
        %676 = vrot.lane.b32.xlu0 %v314, 104
        %v677 = vpop.permute.xlu0 %676
        %678 = vrot.lane.b32.xlu0 %v316, 104
        %v679 = vpop.permute.xlu0 %678
        %v681 = vsel %vm325, %v677, 0
        %v684 = vsel %vm325, %v679, 0
        %686 = vmatprep.subr.bf16.mxu0 0
        %687 = vmatpush1.bf16.xpose.msra.mxu0 %v684
        %688 = vmatprep.subr.bf16.mxu0 0
        %689 = vmatpush1.bf16.xpose.msra.mxu0 0
        %690 = vmatprep.subr.bf16.mxu0 0
        %691 = vmatpush1.bf16.xpose.msra.mxu0 0
        %692 = vmatprep.subr.bf16.mxu0 0
        %693 = vmatpush1.bf16.xpose.msra.mxu0 0
        %694 = vmatprep.subr.bf16.mxu0 0
        %695 = vmatpush1.bf16.xpose.msra.mxu0 0
        %696 = vmatprep.subr.bf16.mxu0 0
        %697 = vmatpush1.bf16.xpose.msra.mxu0 0
        %698 = vmatprep.subr.bf16.mxu0 0
        %699 = vmatpush1.bf16.xpose.msra.mxu0 0
        %700 = vmatprep.subr.bf16.mxu0 0
        %701 = vmatpush1.bf16.xpose.msra.mxu0 0
        %702 = vmatprep.subr.bf16.mxu0 0
        %703 = vmatpush1.bf16.xpose.msra.mxu0 0
        %704 = vmatprep.subr.bf16.mxu0 0
        %705 = vmatpush1.bf16.xpose.msra.mxu0 0
        %706 = vmatprep.subr.bf16.mxu0 0
        %707 = vmatpush1.bf16.xpose.msra.mxu0 0
        %708 = vmatprep.subr.bf16.mxu0 0
        %709 = vmatpush1.bf16.xpose.msra.mxu0 0
        %710 = vmatprep.subr.bf16.mxu0 0
        %711 = vmatpush1.bf16.xpose.msra.mxu0 0
        %712 = vmatprep.subr.bf16.mxu0 0
        %713 = vmatpush1.bf16.xpose.msra.mxu0 0
        %714 = vmatprep.subr.bf16.mxu0 0
        %715 = vmatpush1.bf16.xpose.msra.mxu0 0
        %716 = vmatprep.subr.bf16.mxu0 0
        %717 = vmatpush1.bf16.xpose.msra.mxu0 0
        %718 = vmatprep.mubr.bf16.mxu0 0
        %719 = vmatmul.mubr.bf16.gmra.mrb[0].mxu0 %v681
        %v720 = vpop.f32.mrb[0].mxu0
        %v721 = vadd.f32 0.0, %v720
        %v722 = vpop.f32.mrb[0].mxu0
        %v723 = vpop.f32.mrb[0].mxu0
        %v724 = vpop.f32.mrb[0].mxu0
        %725 = vdwg.mxu0
        %v726 = vsel %vm324, %v721, -1e+09
        %v727 = vsel %vm325, %v726, -inf
        %728 = vmax.xlane.f32.xlu0 %v727
        %v729 = vpop.xlane.xlu0 %728
        %v730 = vsub.f32 %v726, %v729
        %v731 = vmul.f32 %v730, 1.442695
        %v732 = vpow.pop %v731
        %v733 = vsel %vm325, %v732, 0.0
        %734 = vadd.xlane.f32.xlu0 %v733
        %v735 = vpop.xlane.xlu0 %734
        %v736 = vrcp.pop %v735
        %v737 = vmul.f32 %v732, %v736
        %s738 = scalar_lea.vmem %s310, 24 [#allocation9]
        %739 = vst.msk [vmem:[%s738] sm:$0xff] %vm325, %v737
        %v740 = vpack.c.bf16 %v737, %v737
        %741 = vrot.lane.b32.xlu0 %v316, 72
        %v742 = vpop.permute.xlu0 %741
        %v744 = vsel %vm325, %v740, 0
        %v747 = vsel %vm392, %v742, 0
        %749 = vmatprep.subr.bf16.mxu0 0
        %750 = vmatpush1.bf16.msra.mxu0 %v747
        %751 = vmatprep.subr.bf16.mxu0 0
        %752 = vmatpush1.bf16.msra.mxu0 0
        %753 = vmatprep.subr.bf16.mxu0 0
        %754 = vmatpush1.bf16.msra.mxu0 0
        %755 = vmatprep.subr.bf16.mxu0 0
        %756 = vmatpush1.bf16.msra.mxu0 0
        %757 = vmatprep.subr.bf16.mxu0 0
        %758 = vmatpush1.bf16.msra.mxu0 0
        %759 = vmatprep.subr.bf16.mxu0 0
        %760 = vmatpush1.bf16.msra.mxu0 0
        %761 = vmatprep.subr.bf16.mxu0 0
        %762 = vmatpush1.bf16.msra.mxu0 0
        %763 = vmatprep.subr.bf16.mxu0 0
        %764 = vmatpush1.bf16.msra.mxu0 0
        %765 = vmatprep.subr.bf16.mxu0 0
        %766 = vmatpush1.bf16.msra.mxu0 0
        %767 = vmatprep.subr.bf16.mxu0 0
        %768 = vmatpush1.bf16.msra.mxu0 0
        %769 = vmatprep.subr.bf16.mxu0 0
        %770 = vmatpush1.bf16.msra.mxu0 0
        %771 = vmatprep.subr.bf16.mxu0 0
        %772 = vmatpush1.bf16.msra.mxu0 0
        %773 = vmatprep.subr.bf16.mxu0 0
        %774 = vmatpush1.bf16.msra.mxu0 0
        %775 = vmatprep.subr.bf16.mxu0 0
        %776 = vmatpush1.bf16.msra.mxu0 0
        %777 = vmatprep.subr.bf16.mxu0 0
        %778 = vmatpush1.bf16.msra.mxu0 0
        %779 = vmatprep.subr.bf16.mxu0 0
        %780 = vmatpush1.bf16.msra.mxu0 0
        %781 = vmatprep.mubr.bf16.mxu0 0
        %782 = vmatmul.mubr.bf16.gmra.mrb[0].mxu0 %v744
        %v783 = vpop.f32.mrb[0].mxu0
        %v784 = vadd.f32 0.0, %v783
        %v785 = vpop.f32.mrb[0].mxu0
        %v786 = vpop.f32.mrb[0].mxu0
        %v787 = vpop.f32.mrb[0].mxu0
        %788 = vdwg.mxu0
        %790 = vrot.lane.b32.xlu0 %v784, 24
        %v791 = vpop.permute.xlu0 %790
        %vm793 = vcmask 261312
        %794 = vst.msk [vmem:[%s303] sm:$0xff] %vm793, %v791
        %s795 = sand.u32 %s130, 1
        %s796 = scalar_lea.sflag [#allocation4], %s795
        %s797 = sand.u32 %s130, 1
        %s798 = smul.addr %s797, 8
        %s799 = scalar_lea.vmem [#allocation8], %s798
        %s800 = sand.u32 %s158, 1
        %s801 = scalar_lea.sflag [#allocation10], %s800
        %s802 = sand.u32 %s158, 1
        %s803 = smul.addr %s802, 32
        %s804 = scalar_lea.vmem [#allocation9], %s803
        // Predicated region
        $region45: #{fwd.6} parent=31 // pred_check
          %p805 = pneg %p140
        $region46: #{fwd.6} parent=31 // pred_check_branch
          %807 = sbr.rel (%p805) target = $region48
        $region47: #{fwd.6} parent=31 // pred_region
          %s809 = ssub.s32 128, 128
          %810 = vsyncadd %s796, %s809
          %s811 = sadd.s32 %s33, %s32
          %s812 = smul.addr %s811, 128
          %s813 = scalar_lea.hbm %s3, %s812
          %s815 = sshll.u32 %s799, 4
          %s816 = int_to_ptr.vmem [resolvable:$true] %s815
          %818 = dma.vmem_to_hbm [thread:$0]  %s816, 128, %s813, %s796
        $region48: #{fwd.6} parent=31 // pred_fallthru
          _
        // Predicated region
        $region49: #{fwd.6} parent=31 // pred_check
          %p819 = pneg %p168
        $region50: #{fwd.6} parent=31 // pred_check_branch
          %821 = sbr.rel (%p819) target = $region52
        $region51: #{fwd.6} parent=31 // pred_region
          %s823 = ssub.s32 512, 512
          %824 = vsyncadd %s801, %s823
          %s825 = smul.addr %s32, 4
          %s826 = sadd.s32 %s33, %s825
          %s827 = smul.addr %s826, 128
          %s828 = scalar_lea.hbm %s4, %s827
          %s829 = sshll.u32 %s804, 4
          %s830 = int_to_ptr.vmem [resolvable:$true] %s829
          %835 = dma.vmem_to_hbm [thread:$0]  %s830, 512, %s828, %s801, 128, 128, 8
        $region52: #{fwd.6} parent=31 // pred_fallthru
          _
      $region32: #{fwd.6} parent=5 // pred_fallthru
        _
      %p836 = scmp.le.s32.totalorder 2, %s23
      // Predicated region
      $region53: #{fwd.6} parent=5 // pred_check
        %p837 = pneg %p836
      $region54: #{fwd.6} parent=5 // pred_check_branch
        %839 = sbr.rel (%p837) target = $region56
      $region55: #{fwd.6} parent=5 // pred_region
        %s840 = ssub.s32 %s23, 2
        // Predicated region
        $region57: #{fwd.6} parent=55 // pred_check
          %p841 = pneg %p146
        $region58: #{fwd.6} parent=55 // pred_check_branch
          %843 = sbr.rel (%p841) target = $region60
        $region59: #{fwd.6} parent=55 // pred_region
          %s844 = sand.u32 %s131, 1
          %s845 = scalar_lea.sflag [#allocation4], %s844
          %s846 = sand.u32 %s131, 1
          %s847 = smul.addr %s846, 8
          %s848 = scalar_lea.vmem [#allocation8], %s847
          %849 = dma.done %s845, 128
        $region60: #{fwd.6} parent=55 // pred_fallthru
          _
        // Predicated region
        $region61: #{fwd.6} parent=55 // pred_check
          %p850 = pneg %p174
        $region62: #{fwd.6} parent=55 // pred_check_branch
          %852 = sbr.rel (%p850) target = $region64
        $region63: #{fwd.6} parent=55 // pred_region
          %s853 = sand.u32 %s159, 1
          %s854 = scalar_lea.sflag [#allocation10], %s853
          %s855 = sand.u32 %s159, 1
          %s856 = smul.addr %s855, 32
          %s857 = scalar_lea.vmem [#allocation9], %s856
          %858 = dma.done %s854, 512
        $region64: #{fwd.6} parent=55 // pred_fallthru
          _
      $region56: #{fwd.6} parent=5 // pred_fallthru
        _
    $region6: #{fwd.6} parent=1 // loop_footer
      %s27 = sadd.s32 1, %s23
    $region7: #{fwd.6} parent=1 // loop_footer_branch
      %22 = sbr.rel target = $region3
    $region8: #{fwd.6} parent=1 // loop_exit
      _
    %859 = vsyncpa [#allocation3], 1
    %s860 = scalar_lea.sflag [#allocation3], 1
    %861 = vsyncpa %s860, 1
    %862 = vsyncpa [#allocation6], 1
    %s863 = scalar_lea.sflag [#allocation6], 1
    %864 = vsyncpa %s863, 1
    %865 = vsyncpa [#allocation4], 1
    %s866 = scalar_lea.sflag [#allocation4], 1
    %867 = vsyncpa %s866, 1
    %868 = vsyncpa [#allocation10], 1
    %s869 = scalar_lea.sflag [#allocation10], 1
    %870 = vsyncpa %s869, 1

</llo_original>
